<compile_context>
chip_gen: v5e
topology: v5e:2x2
jax: 0.10.0
libtpu: 0.0.40
codegen_flags: <defaults>
</compile_context>

<pallas_src>
import math

import jax
import jax.numpy as jnp
import numpy as np
from jax.experimental import pallas as pl
from jax.experimental.pallas import tpu as pltpu

KERNEL_SIZE = 5
PAD = KERNEL_SIZE // 2  # 2


def _mask_type_a(k=KERNEL_SIZE):
    """PixelCNN 'A' mask: zero the centre tap and everything after it (raster order)."""
    m = np.ones((k, k), dtype=np.float32)
    m[k // 2, k // 2:] = 0.0
    m[k // 2 + 1:, :] = 0.0
    return m


_MASK_A = _mask_type_a()
# Static list of active taps -> statically unrolled inside the kernel.
ACTIVE_TAPS = [(ky, kx)
               for ky in range(KERNEL_SIZE)
               for kx in range(KERNEL_SIZE)
               if _MASK_A[ky, kx] > 0.0]
NTAPS = len(ACTIVE_TAPS)  # 12


def _pick_tile_rows(out_rows, max_rows=256):
    """Largest multiple-of-8 divisor of out_rows that is <= max_rows (else full extent)."""
    if out_rows <= max_rows:
        return out_rows
    for t in range(max_rows - max_rows % 8, 7, -8):
        if out_rows % t == 0:
            return t
    return out_rows  # fall back to one full block (still correct)


def context_prediction_pallas(x_nchw, params):
    """Masked 5x5 conv ('A'), stride 1, pad 2.  x_nchw: (N, C_in, H, W) -> (N, 2*C_in, H, W)."""
    wt = params["w"]   # (C_out, C_in, 5, 5)  PyTorch OIHW layout
    b = params["b"]    # (C_out,)
    n, c_in, h, w_sp = x_nchw.shape
    c_out = wt.shape[0]

    wp = w_sp + 2 * PAD          # padded width
    hp = h + PAD + 1             # top pad 2, bottom pad 1 (slack for the largest shift)
    n_pix = hp * wp              # flattened padded pixels per image
    out_rows = h * wp            # wide output frame per image (cols >= W are scratch)

    # NCHW -> NHWC, zero-pad spatial dims, flatten (row, col) -> pixel axis.
    x_nhwc = jnp.transpose(x_nchw, (0, 2, 3, 1))
    x_padded = jnp.pad(x_nhwc, ((0, 0), (PAD, 1), (PAD, PAD), (0, 0)))
    x_flat = x_padded.reshape(n, n_pix, c_in)

    # Pre-mask weights, cast to the compute dtype, transpose each tap to (C_in, C_out).
    mask = jnp.asarray(_MASK_A, dtype=wt.dtype)
    wm = (wt * mask[None, None, :, :]).astype(x_nchw.dtype)

    # --- Tap grouping along K (fills the MXU; lane-dense LHS) ---------------------
    group = max(1, min(NTAPS, 256 // max(1, c_in)))   # e.g. 4 for C_in=64, 2 for 128
    w_taps = [jnp.transpose(wm[:, :, ky, kx]) for (ky, kx) in ACTIVE_TAPS]
    shifts = [ky * wp + kx for (ky, kx) in ACTIVE_TAPS]       # static python ints
    while len(w_taps) % group:                                 # pad with zero-weight taps
        w_taps.append(jnp.zeros((c_in, c_out), wm.dtype))
        shifts.append(0)
    n_groups = len(w_taps) // group
    group_shifts = tuple(tuple(shifts[g * group:(g + 1) * group])
                         for g in range(n_groups))
    gk = group * c_in
    # (n_groups, group*C_in, C_out); row order matches the in-kernel LHS concat order.
    w_groups = jnp.stack(
        [jnp.concatenate(w_taps[g * group:(g + 1) * group], axis=0)
         for g in range(n_groups)], axis=0)

    b2 = b.reshape(1, c_out).astype(x_nchw.dtype)

    # --- Row tiling of the output frame -------------------------------------------
    tile_rows = _pick_tile_rows(out_rows)
    n_tiles = out_rows // tile_rows
    align = tile_rows & (-tile_rows)          # largest power-of-2 factor of tile_rows

    def kernel(x_ref, w_ref, b_ref, o_ref):
        j = pl.program_id(1)
        base = pl.multiple_of(j * tile_rows, align)

        def group_lhs(g):
            parts = [x_ref[pl.ds(base + s, tile_rows), :] for s in group_shifts[g]]
            if len(parts) == 1:
                return parts[0]
            return jnp.concatenate(parts, axis=-1)          # (tile_rows, group*C_in)

        # Accumulator lives as a value (vregs), not VMEM scratch; bias folded into the
        # epilogue; native-dtype operands with f32 accumulation on the MXU.
        acc = jnp.dot(group_lhs(0), w_ref[0], preferred_element_type=jnp.float32)
        for g in range(1, n_groups):
            acc = acc + jnp.dot(group_lhs(g), w_ref[g],
                                preferred_element_type=jnp.float32)
        o_ref[...] = (acc + b_ref[...].astype(jnp.float32)).astype(o_ref.dtype)

    out_frame = pl.pallas_call(
        kernel,
        out_shape=jax.ShapeDtypeStruct((n, out_rows, c_out), x_nchw.dtype),
        grid_spec=pltpu.PrefetchScalarGridSpec(
            num_scalar_prefetch=0,
            grid=(n, n_tiles),
            in_specs=[
                # whole padded image per batch element; invariant across j -> no re-DMA
                pl.BlockSpec((None, n_pix, c_in), lambda i, j: (i, 0, 0)),
                # grouped, pre-masked, pre-transposed weights (grid-invariant)
                pl.BlockSpec((n_groups, gk, c_out), lambda i, j: (0, 0, 0)),
                pl.BlockSpec((1, c_out), lambda i, j: (0, 0)),
            ],
            out_specs=pl.BlockSpec((None, tile_rows, c_out), lambda i, j: (i, j, 0)),
        ),
        compiler_params=pltpu.CompilerParams(
            dimension_semantics=("parallel", "parallel"),
            vmem_limit_bytes=32 * 1024 * 1024),
    )(x_flat, w_groups, b2)

    # (N, H*Wp, C_out) -> (N, H, Wp, C_out) -> drop scratch columns -> NCHW.
    out = out_frame.reshape(n, h, wp, c_out)[:, :, :w_sp, :]
    return jnp.transpose(out, (0, 3, 1, 2))


def init_params(key, channel_in, dtype=jnp.float32):
    """PyTorch Conv2d-style uniform init: U(-1/sqrt(fan_in), 1/sqrt(fan_in))."""
    c_out = 2 * channel_in
    fan_in = channel_in * KERNEL_SIZE * KERNEL_SIZE
    bound = 1.0 / math.sqrt(fan_in)
    kw, kb = jax.random.split(key)
    w = jax.random.uniform(kw, (c_out, channel_in, KERNEL_SIZE, KERNEL_SIZE),
                           dtype, -bound, bound)
    b = jax.random.uniform(kb, (c_out,), dtype, -bound, bound)
    return {"w": w, "b": b}


def reference_forward(x_nchw, params):
    """Plain-JAX reference: standard conv with the 'A'-masked weights + bias."""
    wm = params["w"] * jnp.asarray(_MASK_A, params["w"].dtype)[None, None, :, :]
    out = jax.lax.conv_general_dilated(
        x_nchw, wm, window_strides=(1, 1),
        padding=((PAD, PAD), (PAD, PAD)),
        dimension_numbers=("NCHW", "OIHW", "NCHW"),
        precision=jax.lax.Precision.HIGHEST)
    return out + params["b"][None, :, None, None]


if __name__ == "__main__":
    key = jax.random.PRNGKey(0)
    k_x, k_p = jax.random.split(key)

    # Small but lane-friendly config: channel_in = 64 -> masked 5x5 conv 64 -> 128.
    N, C_IN, H, W = 2, 64, 16, 16
    x = jax.random.normal(k_x, (N, C_IN, H, W), jnp.float32)
    params = init_params(k_p, C_IN)

    out = jax.jit(context_prediction_pallas)(x, params)
    out = jax.block_until_ready(out)

    ref = reference_forward(x, params)
    assert out.shape == (N, 2 * C_IN, H, W), out.shape
    max_err = float(jnp.max(jnp.abs(out - ref)))
    assert jnp.allclose(out, ref, atol=2e-3, rtol=2e-3), f"mismatch vs reference: {max_err}"

    print("KERNEL_OK")
</pallas_src>

<mosaic_0001>
module attributes {stable_mosaic.version = 11 : i64} {
  func.func @kernel(%arg0: i32, %arg1: i32, %arg2: memref<1x380x64xf32, #tpu.memory_space<vmem>>, %arg3: memref<3x256x128xf32, #tpu.memory_space<vmem>>, %arg4: memref<1x128xf32, #tpu.memory_space<vmem>>, %arg5: memref<1x160x128xf32, #tpu.memory_space<vmem>>) attributes {dimension_semantics = [#tpu.dimension_semantics<parallel>, #tpu.dimension_semantics<parallel>], iteration_bounds = array<i64: 2, 2>, scalar_prefetch = 0 : i64, scratch_operands = 0 : i64, tpu.core_type = #tpu.core_type<tc>, window_params = [{transform_indices = @transform_0, window_bounds = array<i64: 1, 380, 64>}, {pipeline_mode = #tpu.pipeline_mode<synchronous>, transform_indices = @transform_1, window_bounds = array<i64: 3, 256, 128>}, {pipeline_mode = #tpu.pipeline_mode<synchronous>, transform_indices = @transform_2, window_bounds = array<i64: 1, 128>}, {transform_indices = @transform_3, window_bounds = array<i64: 1, 160, 128>}]} {
    %c160_i32 = arith.constant 160 : i32
    %0 = arith.muli %arg1, %c160_i32 : i32
    %1 = tpu.assume_multiple %0, 32 : i32
    %c0_i32 = arith.constant 0 : i32
    %2 = arith.addi %1, %c0_i32 : i32
    %c0 = arith.constant 0 : index
    %3 = arith.index_cast %2 : i32 to index
    %c0_0 = arith.constant 0 : index
    %4 = vector.load %arg2[%c0, %3, %c0_0] : memref<1x380x64xf32, #tpu.memory_space<vmem>>, vector<1x160x64xf32>
    %5 = vector.shape_cast %4 : vector<1x160x64xf32> to vector<160x64xf32>
    %c1_i32 = arith.constant 1 : i32
    %6 = arith.addi %1, %c1_i32 : i32
    %c0_1 = arith.constant 0 : index
    %7 = arith.index_cast %6 : i32 to index
    %c0_2 = arith.constant 0 : index
    %8 = vector.load %arg2[%c0_1, %7, %c0_2] : memref<1x380x64xf32, #tpu.memory_space<vmem>>, vector<1x160x64xf32>
    %9 = vector.shape_cast %8 : vector<1x160x64xf32> to vector<160x64xf32>
    %c2_i32 = arith.constant 2 : i32
    %10 = arith.addi %1, %c2_i32 : i32
    %c0_3 = arith.constant 0 : index
    %11 = arith.index_cast %10 : i32 to index
    %c0_4 = arith.constant 0 : index
    %12 = vector.load %arg2[%c0_3, %11, %c0_4] : memref<1x380x64xf32, #tpu.memory_space<vmem>>, vector<1x160x64xf32>
    %13 = vector.shape_cast %12 : vector<1x160x64xf32> to vector<160x64xf32>
    %c3_i32 = arith.constant 3 : i32
    %14 = arith.addi %1, %c3_i32 : i32
    %c0_5 = arith.constant 0 : index
    %15 = arith.index_cast %14 : i32 to index
    %c0_6 = arith.constant 0 : index
    %16 = vector.load %arg2[%c0_5, %15, %c0_6] : memref<1x380x64xf32, #tpu.memory_space<vmem>>, vector<1x160x64xf32>
    %17 = vector.shape_cast %16 : vector<1x160x64xf32> to vector<160x64xf32>
    %18 = tpu.concatenate %5, %9, %13, %17 in 1 : vector<160x64xf32>, vector<160x64xf32>, vector<160x64xf32>, vector<160x64xf32> -> vector<160x256xf32>
    %c0_7 = arith.constant 0 : index
    %c0_8 = arith.constant 0 : index
    %c0_9 = arith.constant 0 : index
    %19 = vector.load %arg3[%c0_7, %c0_8, %c0_9] : memref<3x256x128xf32, #tpu.memory_space<vmem>>, vector<1x256x128xf32>
    %20 = vector.shape_cast %19 : vector<1x256x128xf32> to vector<256x128xf32>
    %cst = arith.constant dense<0.000000e+00> : vector<160x128xf32>
    %21 = tpu.matmul %18, %20, %cst {dimension_numbers = #tpu.dot_dimension_numbers<[1], [0], [0], [1], [0, 0, 1, 1], [], []>} : vector<160x256xf32>, vector<256x128xf32>, vector<160x128xf32> -> vector<160x128xf32>
    %c4_i32 = arith.constant 4 : i32
    %22 = arith.addi %1, %c4_i32 : i32
    %c0_10 = arith.constant 0 : index
    %23 = arith.index_cast %22 : i32 to index
    %c0_11 = arith.constant 0 : index
    %24 = vector.load %arg2[%c0_10, %23, %c0_11] : memref<1x380x64xf32, #tpu.memory_space<vmem>>, vector<1x160x64xf32>
    %25 = vector.shape_cast %24 : vector<1x160x64xf32> to vector<160x64xf32>
    %c20_i32 = arith.constant 20 : i32
    %26 = arith.addi %1, %c20_i32 : i32
    %c0_12 = arith.constant 0 : index
    %27 = arith.index_cast %26 : i32 to index
    %c0_13 = arith.constant 0 : index
    %28 = vector.load %arg2[%c0_12, %27, %c0_13] : memref<1x380x64xf32, #tpu.memory_space<vmem>>, vector<1x160x64xf32>
    %29 = vector.shape_cast %28 : vector<1x160x64xf32> to vector<160x64xf32>
    %c21_i32 = arith.constant 21 : i32
    %30 = arith.addi %1, %c21_i32 : i32
    %c0_14 = arith.constant 0 : index
    %31 = arith.index_cast %30 : i32 to index
    %c0_15 = arith.constant 0 : index
    %32 = vector.load %arg2[%c0_14, %31, %c0_15] : memref<1x380x64xf32, #tpu.memory_space<vmem>>, vector<1x160x64xf32>
    %33 = vector.shape_cast %32 : vector<1x160x64xf32> to vector<160x64xf32>
    %c22_i32 = arith.constant 22 : i32
    %34 = arith.addi %1, %c22_i32 : i32
    %c0_16 = arith.constant 0 : index
    %35 = arith.index_cast %34 : i32 to index
    %c0_17 = arith.constant 0 : index
    %36 = vector.load %arg2[%c0_16, %35, %c0_17] : memref<1x380x64xf32, #tpu.memory_space<vmem>>, vector<1x160x64xf32>
    %37 = vector.shape_cast %36 : vector<1x160x64xf32> to vector<160x64xf32>
    %38 = tpu.concatenate %25, %29, %33, %37 in 1 : vector<160x64xf32>, vector<160x64xf32>, vector<160x64xf32>, vector<160x64xf32> -> vector<160x256xf32>
    %c1 = arith.constant 1 : index
    %c0_18 = arith.constant 0 : index
    %c0_19 = arith.constant 0 : index
    %39 = vector.load %arg3[%c1, %c0_18, %c0_19] : memref<3x256x128xf32, #tpu.memory_space<vmem>>, vector<1x256x128xf32>
    %40 = vector.shape_cast %39 : vector<1x256x128xf32> to vector<256x128xf32>
    %cst_20 = arith.constant dense<0.000000e+00> : vector<160x128xf32>
    %41 = tpu.matmul %38, %40, %cst_20 {dimension_numbers = #tpu.dot_dimension_numbers<[1], [0], [0], [1], [0, 0, 1, 1], [], []>} : vector<160x256xf32>, vector<256x128xf32>, vector<160x128xf32> -> vector<160x128xf32>
    %42 = arith.addf %21, %41 : vector<160x128xf32>
    %c23_i32 = arith.constant 23 : i32
    %43 = arith.addi %1, %c23_i32 : i32
    %c0_21 = arith.constant 0 : index
    %44 = arith.index_cast %43 : i32 to index
    %c0_22 = arith.constant 0 : index
    %45 = vector.load %arg2[%c0_21, %44, %c0_22] : memref<1x380x64xf32, #tpu.memory_space<vmem>>, vector<1x160x64xf32>
    %46 = vector.shape_cast %45 : vector<1x160x64xf32> to vector<160x64xf32>
    %c24_i32 = arith.constant 24 : i32
    %47 = arith.addi %1, %c24_i32 : i32
    %c0_23 = arith.constant 0 : index
    %48 = arith.index_cast %47 : i32 to index
    %c0_24 = arith.constant 0 : index
    %49 = vector.load %arg2[%c0_23, %48, %c0_24] : memref<1x380x64xf32, #tpu.memory_space<vmem>>, vector<1x160x64xf32>
    %50 = vector.shape_cast %49 : vector<1x160x64xf32> to vector<160x64xf32>
    %c40_i32 = arith.constant 40 : i32
    %51 = arith.addi %1, %c40_i32 : i32
    %c0_25 = arith.constant 0 : index
    %52 = arith.index_cast %51 : i32 to index
    %c0_26 = arith.constant 0 : index
    %53 = vector.load %arg2[%c0_25, %52, %c0_26] : memref<1x380x64xf32, #tpu.memory_space<vmem>>, vector<1x160x64xf32>
    %54 = vector.shape_cast %53 : vector<1x160x64xf32> to vector<160x64xf32>
    %c41_i32 = arith.constant 41 : i32
    %55 = arith.addi %1, %c41_i32 : i32
    %c0_27 = arith.constant 0 : index
    %56 = arith.index_cast %55 : i32 to index
    %c0_28 = arith.constant 0 : index
    %57 = vector.load %arg2[%c0_27, %56, %c0_28] : memref<1x380x64xf32, #tpu.memory_space<vmem>>, vector<1x160x64xf32>
    %58 = vector.shape_cast %57 : vector<1x160x64xf32> to vector<160x64xf32>
    %59 = tpu.concatenate %46, %50, %54, %58 in 1 : vector<160x64xf32>, vector<160x64xf32>, vector<160x64xf32>, vector<160x64xf32> -> vector<160x256xf32>
    %c2 = arith.constant 2 : index
    %c0_29 = arith.constant 0 : index
    %c0_30 = arith.constant 0 : index
    %60 = vector.load %arg3[%c2, %c0_29, %c0_30] : memref<3x256x128xf32, #tpu.memory_space<vmem>>, vector<1x256x128xf32>
    %61 = vector.shape_cast %60 : vector<1x256x128xf32> to vector<256x128xf32>
    %cst_31 = arith.constant dense<0.000000e+00> : vector<160x128xf32>
    %62 = tpu.matmul %59, %61, %cst_31 {dimension_numbers = #tpu.dot_dimension_numbers<[1], [0], [0], [1], [0, 0, 1, 1], [], []>} : vector<160x256xf32>, vector<256x128xf32>, vector<160x128xf32> -> vector<160x128xf32>
    %63 = arith.addf %42, %62 : vector<160x128xf32>
    %c0_32 = arith.constant 0 : index
    %c0_33 = arith.constant 0 : index
    %64 = vector.load %arg4[%c0_32, %c0_33] : memref<1x128xf32, #tpu.memory_space<vmem>>, vector<1x128xf32>
    %65 = vector.broadcast %64 : vector<1x128xf32> to vector<160x128xf32>
    %66 = arith.addf %63, %65 : vector<160x128xf32>
    %c0_34 = arith.constant 0 : index
    %c0_35 = arith.constant 0 : index
    %c0_36 = arith.constant 0 : index
    %67 = vector.load %arg5[%c0_34, %c0_35, %c0_36] : memref<1x160x128xf32, #tpu.memory_space<vmem>>, vector<1x160x128xf32>
    %68 = vector.shape_cast %67 : vector<1x160x128xf32> to vector<160x128xf32>
    %69 = vector.shape_cast %66 : vector<160x128xf32> to vector<1x160x128xf32>
    tpu.vector_store %arg5[%c0_34, %c0_35, %c0_36], %69 {strides = array<i32>} : memref<1x160x128xf32, #tpu.memory_space<vmem>>, vector<1x160x128xf32>,
    return
  }
  func.func @transform_0(%arg0: i32, %arg1: i32) -> (i32, i32, i32) {
    %c0_i32 = arith.constant 0 : i32
    %c0_i32_0 = arith.constant 0 : i32
    %c0_i32_1 = arith.constant 0 : i32
    return %arg0, %c0_i32, %c0_i32_0 : i32, i32, i32
  }
  func.func @transform_1(%arg0: i32, %arg1: i32) -> (i32, i32, i32) {
    %c0_i32 = arith.constant 0 : i32
    %c0_i32_0 = arith.constant 0 : i32
    %c0_i32_1 = arith.constant 0 : i32
    %c0_i32_2 = arith.constant 0 : i32
    return %c0_i32, %c0_i32_0, %c0_i32_1 : i32, i32, i32
  }
  func.func @transform_2(%arg0: i32, %arg1: i32) -> (i32, i32) {
    %c0_i32 = arith.constant 0 : i32
    %c0_i32_0 = arith.constant 0 : i32
    %c0_i32_1 = arith.constant 0 : i32
    return %c0_i32, %c0_i32_0 : i32, i32
  }
  func.func @transform_3(%arg0: i32, %arg1: i32) -> (i32, i32, i32) {
    %c0_i32 = arith.constant 0 : i32
    %c0_i32_0 = arith.constant 0 : i32
    return %arg0, %arg1, %c0_i32 : i32, i32, i32
  }
}

</mosaic_0001>

<llo_original>
// kernel: context_prediction_pallas.1
$region0: #{context_prediction_pallas.1}
  #allocation0 [shape = 'u32[]', space=smem, size = 0x4, offset = 0x4, fixed_abs, tag = 'smem constant byte address 0x4 - core index']
  #allocation1 [shape = 'u32[72,128]{1,0:T(1,128)}', space=vmem, size = 0x9000, scoped, tag = 'internal scratch']
  %s0 = inlined_call_operand.vmem [shape: f32[2,380,64], index: 0, kind: input, shape index: {}]
  %s1 = inlined_call_operand.vmem [shape: f32[3,256,128], index: 1, kind: input, shape index: {}]
  %s2 = inlined_call_operand.vmem [shape: f32[1,128], index: 2, kind: input, shape index: {}]
  %s3 = inlined_call_operand.vmem [shape: f32[2,320,128], index: 3, kind: output, shape index: {}]
  %s4 = sld [smem:[#allocation0]]
  $region45: #{context_prediction_pallas.1} parent=0
    _
  %s6 = ssub.s32 1, %s4
  %s7 = scalar_select 0, %s6, %s4
  loop: start=0, step=1, limit=6
  $region2: #{context_prediction_pallas.1} parent=0 // loop_pre_header
    _
  $region3: #{context_prediction_pallas.1} parent=0 // loop_header
    %s9 = sphi 0, %s13
    %p10 = scmp.ge.s32.totalorder %s9, 6
    %s16 = sphi 0, %s28
    %s17 = sphi 0, %s24
    %s18 = sphi 0, %s16
    %s19 = sphi 0, %s17
    %s20 = sphi 0, %s18
    %s21 = sphi 0, %s19
    %s31 = sphi 0, %s33
    %s34 = sphi 0, %s31
    %s35 = sphi 0, %s34
    %s51 = sphi 0, %s35
    %s55 = sphi 0, %s55
    %s57 = sphi 0, %s55
    %s58 = sphi 0, %s57
    %s72 = sphi 0, %s58
    %s76 = sphi 0, %s76
    %s78 = sphi 0, %s76
    %s79 = sphi 0, %s78
    %s93 = sphi 0, %s79
    %s101 = sphi 0, %s103
    %s104 = sphi 0, %s101
    %s105 = sphi 0, %s104
    %s121 = sphi 0, %s105
  $region4: #{context_prediction_pallas.1} parent=0 // loop_header_branch
    %12 = sbr.rel (%p10) target = $region8
  $region5: #{context_prediction_pallas.1} parent=0 // loop_body
    %s14 = ssub.s32 %s9, 1
    %s15 = ssub.s32 %s9, 2
    %s22 = sadd.s32 1, %s17
    %p23 = scmp.ge.s32.totalorder %s22, 2
    %s24 = scalar_select %p23, 0, %s22
    %s25 = sadd.s32 1, %s16
    %s26 = scalar_select %p23, %s25, %s16
    %p27 = scmp.ge.s32.totalorder %s26, 2
    %s28 = scalar_select %p27, 0, %s26
    %s29 = ssub.s32 %s16, %s28
    %p30 = scmp.eq.s32.totalorder %s29, 0
    %s32 = sadd.s32 %s31, 1
    %s33 = scalar_select %p30, %s31, %s32
    %p36 = pneg %p30
    %p37 = scmp.eq.s32.totalorder %s9, 3
    %p38 = por %p36, %p37
    %p39 = scmp.ne.s32.totalorder %s31, %s34
    %p40 = scmp.eq.s32.totalorder %s9, 0
    %p41 = por %p39, %p40
    %p42 = scmp.ne.s32.totalorder %s31, %s34
    %p43 = scmp.eq.s32.totalorder %s14, 3
    %p44 = por %p42, %p43
    %p45 = scmp.ne.s32.totalorder %s34, %s35
    %p46 = scmp.eq.s32.totalorder %s14, 0
    %p47 = por %p45, %p46
    %p48 = scmp.ne.s32.totalorder %s34, %s35
    %p49 = scmp.eq.s32.totalorder %s15, 3
    %p50 = por %p48, %p49
    %p52 = scmp.ne.s32.totalorder %s35, %s51
    %p53 = scmp.eq.s32.totalorder %s15, 0
    %p54 = por %p52, %p53
    %s56 = sadd.s32 %s55, 1
    %p59 = scmp.eq.s32.totalorder %s9, 3
    %p60 = scmp.ne.s32.totalorder %s55, %s57
    %p61 = scmp.eq.s32.totalorder %s9, 0
    %p62 = por %p60, %p61
    %p63 = scmp.ne.s32.totalorder %s55, %s57
    %p64 = scmp.eq.s32.totalorder %s14, 3
    %p65 = por %p63, %p64
    %p66 = scmp.ne.s32.totalorder %s57, %s58
    %p67 = scmp.eq.s32.totalorder %s14, 0
    %p68 = por %p66, %p67
    %p69 = scmp.ne.s32.totalorder %s57, %s58
    %p70 = scmp.eq.s32.totalorder %s15, 3
    %p71 = por %p69, %p70
    %p73 = scmp.ne.s32.totalorder %s58, %s72
    %p74 = scmp.eq.s32.totalorder %s15, 0
    %p75 = por %p73, %p74
    %s77 = sadd.s32 %s76, 1
    %p80 = scmp.eq.s32.totalorder %s9, 3
    %p81 = scmp.ne.s32.totalorder %s76, %s78
    %p82 = scmp.eq.s32.totalorder %s9, 0
    %p83 = por %p81, %p82
    %p84 = scmp.ne.s32.totalorder %s76, %s78
    %p85 = scmp.eq.s32.totalorder %s14, 3
    %p86 = por %p84, %p85
    %p87 = scmp.ne.s32.totalorder %s78, %s79
    %p88 = scmp.eq.s32.totalorder %s14, 0
    %p89 = por %p87, %p88
    %p90 = scmp.ne.s32.totalorder %s78, %s79
    %p91 = scmp.eq.s32.totalorder %s15, 3
    %p92 = por %p90, %p91
    %p94 = scmp.ne.s32.totalorder %s79, %s93
    %p95 = scmp.eq.s32.totalorder %s15, 0
    %p96 = por %p94, %p95
    %s97 = ssub.s32 %s16, %s28
    %s98 = ssub.s32 %s17, %s24
    %s99 = sor.u32 %s97, %s98
    %p100 = scmp.eq.s32.totalorder %s99, 0
    %s102 = sadd.s32 %s101, 1
    %s103 = scalar_select %p100, %s101, %s102
    %p106 = pneg %p100
    %p107 = scmp.eq.s32.totalorder %s9, 3
    %p108 = por %p106, %p107
    %p109 = scmp.ne.s32.totalorder %s101, %s104
    %p110 = scmp.eq.s32.totalorder %s9, 0
    %p111 = por %p109, %p110
    %p112 = scmp.ne.s32.totalorder %s101, %s104
    %p113 = scmp.eq.s32.totalorder %s14, 3
    %p114 = por %p112, %p113
    %p115 = scmp.ne.s32.totalorder %s104, %s105
    %p116 = scmp.eq.s32.totalorder %s14, 0
    %p117 = por %p115, %p116
    %p118 = scmp.ne.s32.totalorder %s104, %s105
    %p119 = scmp.eq.s32.totalorder %s15, 3
    %p120 = por %p118, %p119
    %p122 = scmp.ne.s32.totalorder %s105, %s121
    %p123 = scmp.eq.s32.totalorder %s15, 0
    %p124 = por %p122, %p123
    %p125 = scmp.le.s32.totalorder 1, %s9
    %p126 = scmp.lt.s32.totalorder %s9, 5
    %p127 = pnand %p125, %p126
    %p128 = pneg %p127
    // Predicated region
    $region9: #{context_prediction_pallas.1} parent=5 // pred_check
      _
    $region10: #{context_prediction_pallas.1} parent=5 // pred_check_branch
      %130 = sbr.rel (%p127) target = $region12
    $region11: #{context_prediction_pallas.1} parent=5 // pred_region
      %s131 = ssub.s32 %s9, 1
      // Predicated region
      $region13: #{context_prediction_pallas.1} parent=11 // pred_check
        %p132 = pneg %p68
      $region14: #{context_prediction_pallas.1} parent=11 // pred_check_branch
        %134 = sbr.rel (%p132) target = $region16
      $region15: #{context_prediction_pallas.1} parent=11 // pred_region
        _
      $region16: #{context_prediction_pallas.1} parent=11 // pred_fallthru
        _
      // Predicated region
      $region17: #{context_prediction_pallas.1} parent=11 // pred_check
        %p135 = pneg %p89
      $region18: #{context_prediction_pallas.1} parent=11 // pred_check_branch
        %137 = sbr.rel (%p135) target = $region20
      $region19: #{context_prediction_pallas.1} parent=11 // pred_region
        _
      $region20: #{context_prediction_pallas.1} parent=11 // pred_fallthru
        _
    $region12: #{context_prediction_pallas.1} parent=5 // pred_fallthru
      _
    %p138 = scmp.lt.s32.totalorder %s9, 4
    // Predicated region
    $region21: #{context_prediction_pallas.1} parent=5 // pred_check
      %p139 = pneg %p138
    $region22: #{context_prediction_pallas.1} parent=5 // pred_check_branch
      %141 = sbr.rel (%p139) target = $region24
    $region23: #{context_prediction_pallas.1} parent=5 // pred_region
      // Predicated region
      $region25: #{context_prediction_pallas.1} parent=23 // pred_check
        %p142 = pneg %p41
      $region26: #{context_prediction_pallas.1} parent=23 // pred_check_branch
        %144 = sbr.rel (%p142) target = $region28
      $region27: #{context_prediction_pallas.1} parent=23 // pred_region
        %p145 = scmp.lt.s32.totalorder %s16, 1
        %s146 = scalar_select %p145, %s16, 1
        %s147 = smul.addr %s146, 48
        %s148 = smul.addr %s147, 8
        %s149 = scalar_lea.vmem %s0, %s148
      $region28: #{context_prediction_pallas.1} parent=23 // pred_fallthru
        _
    $region24: #{context_prediction_pallas.1} parent=5 // pred_fallthru
      _
    %p150 = scmp.le.s32.totalorder 1, %s9
    %p151 = scmp.lt.s32.totalorder %s9, 5
    %p152 = pnand %p150, %p151
    %p153 = pneg %p152
    // Predicated region
    $region29: #{context_prediction_pallas.1} parent=5 // pred_check
      _
    $region30: #{context_prediction_pallas.1} parent=5 // pred_check_branch
      %155 = sbr.rel (%p152) target = $region32
    $region31: #{context_prediction_pallas.1} parent=5 // pred_region
      %s156 = ssub.s32 %s9, 1
      %p157 = scmp.lt.s32.totalorder %s18, 1
      %s158 = scalar_select %p157, %s18, 1
      %s159 = smul.addr %s158, 48
      %s160 = smul.addr %s159, 8
      %s161 = scalar_lea.vmem %s0, %s160
      %p162 = pneg %p47
      %p163 = pneg %p44
      %p164 = pneg %p68
      %p165 = pneg %p65
      %p166 = pneg %p89
      %p167 = pneg %p86
      %p168 = pneg %p117
      %p169 = pneg %p114
      %s170 = smul.u32 20, %s19
      %p171 = scmp.lt.s32.totalorder %s18, 1
      %s172 = scalar_select %p171, %s18, 1
      %p173 = scmp.lt.s32.totalorder %s170, 39
      %s174 = scalar_select %p173, %s170, 39
      %s175 = smul.addr %s172, 40
      %s176 = sadd.s32 %s174, %s175
      %s177 = smul.addr %s176, 8
      %s178 = scalar_lea.vmem %s3, %s177
      %p179 = scmp.lt.s32.totalorder %s18, 1
      %s180 = scalar_select %p179, %s18, 1
      %s181 = smul.addr %s180, 48
      %s182 = smul.addr %s181, 8
      %s183 = scalar_lea.vmem %s0, %s182
      %s184 = smul.u32 20, %s19
      %p185 = scmp.lt.s32.totalorder %s18, 1
      %s186 = scalar_select %p185, %s18, 1
      %p187 = scmp.lt.s32.totalorder %s184, 39
      %s188 = scalar_select %p187, %s184, 39
      %s189 = smul.addr %s186, 40
      %s190 = sadd.s32 %s188, %s189
      %s191 = smul.addr %s190, 8
      %s192 = scalar_lea.vmem %s3, %s191
      %s193 = smul.u32 20, %s19
      %s194 = smul.u32 %s19, 160
      %s195 = scalar_lea.vmem %s183, %s194
      %v196 = vld [vmem:[%s195] sm:$0xff]
      %v197 = vld [vmem:[%s195 + $0x8] sm:$0xff]
      %v198 = vld [vmem:[%s195 + $0x10] sm:$0xff]
      %v199 = vld [vmem:[%s195 + $0x18] sm:$0xff]
      %v200 = vld [vmem:[%s195 + $0x20] sm:$0xff]
      %v201 = vld [vmem:[%s195 + $0x28] sm:$0xff]
      %v202 = vld [vmem:[%s195 + $0x30] sm:$0xff]
      %v203 = vld [vmem:[%s195 + $0x38] sm:$0xff]
      %v204 = vld [vmem:[%s195 + $0x40] sm:$0xff]
      %v205 = vld [vmem:[%s195 + $0x48] sm:$0xff]
      %v206 = vld [vmem:[%s195 + $0x50] sm:$0xff]
      %v207 = vld [vmem:[%s195 + $0x58] sm:$0xff]
      %v208 = vld [vmem:[%s195 + $0x60] sm:$0xff]
      %v209 = vld [vmem:[%s195 + $0x68] sm:$0xff]
      %v210 = vld [vmem:[%s195 + $0x70] sm:$0xff]
      %v211 = vld [vmem:[%s195 + $0x78] sm:$0xff]
      %v212 = vld [vmem:[%s195 + $0x80] sm:$0xff]
      %v213 = vld [vmem:[%s195 + $0x88] sm:$0xff]
      %v214 = vld [vmem:[%s195 + $0x90] sm:$0xff]
      %v215 = vld [vmem:[%s195 + $0x98] sm:$0xff]
      %s216 = sadd.s32 %s194, 1
      %s217 = scalar_lea.vmem %s183, %s216
      %v218 = vld [vmem:[%s217] sm:$0xff]
      %v219 = vld [vmem:[%s217 + $0x8] sm:$0xff]
      %v220 = vld [vmem:[%s217 + $0x10] sm:$0xff]
      %v221 = vld [vmem:[%s217 + $0x18] sm:$0xff]
      %v222 = vld [vmem:[%s217 + $0x20] sm:$0xff]
      %v223 = vld [vmem:[%s217 + $0x28] sm:$0xff]
      %v224 = vld [vmem:[%s217 + $0x30] sm:$0xff]
      %v225 = vld [vmem:[%s217 + $0x38] sm:$0xff]
      %v226 = vld [vmem:[%s217 + $0x40] sm:$0xff]
      %v227 = vld [vmem:[%s217 + $0x48] sm:$0xff]
      %v228 = vld [vmem:[%s217 + $0x50] sm:$0xff]
      %v229 = vld [vmem:[%s217 + $0x58] sm:$0xff]
      %v230 = vld [vmem:[%s217 + $0x60] sm:$0xff]
      %v231 = vld [vmem:[%s217 + $0x68] sm:$0xff]
      %v232 = vld [vmem:[%s217 + $0x70] sm:$0xff]
      %v233 = vld [vmem:[%s217 + $0x78] sm:$0xff]
      %v234 = vld [vmem:[%s217 + $0x80] sm:$0xff]
      %v235 = vld [vmem:[%s217 + $0x88] sm:$0xff]
      %v236 = vld [vmem:[%s217 + $0x90] sm:$0xff]
      %v237 = vld [vmem:[%s217 + $0x98] sm:$0xff]
      %s238 = sadd.s32 %s194, 2
      %s239 = scalar_lea.vmem %s183, %s238
      %v240 = vld [vmem:[%s239] sm:$0xff]
      %v241 = vld [vmem:[%s239 + $0x8] sm:$0xff]
      %v242 = vld [vmem:[%s239 + $0x10] sm:$0xff]
      %v243 = vld [vmem:[%s239 + $0x18] sm:$0xff]
      %v244 = vld [vmem:[%s239 + $0x20] sm:$0xff]
      %v245 = vld [vmem:[%s239 + $0x28] sm:$0xff]
      %v246 = vld [vmem:[%s239 + $0x30] sm:$0xff]
      %v247 = vld [vmem:[%s239 + $0x38] sm:$0xff]
      %v248 = vld [vmem:[%s239 + $0x40] sm:$0xff]
      %v249 = vld [vmem:[%s239 + $0x48] sm:$0xff]
      %v250 = vld [vmem:[%s239 + $0x50] sm:$0xff]
      %v251 = vld [vmem:[%s239 + $0x58] sm:$0xff]
      %v252 = vld [vmem:[%s239 + $0x60] sm:$0xff]
      %v253 = vld [vmem:[%s239 + $0x68] sm:$0xff]
      %v254 = vld [vmem:[%s239 + $0x70] sm:$0xff]
      %v255 = vld [vmem:[%s239 + $0x78] sm:$0xff]
      %v256 = vld [vmem:[%s239 + $0x80] sm:$0xff]
      %v257 = vld [vmem:[%s239 + $0x88] sm:$0xff]
      %v258 = vld [vmem:[%s239 + $0x90] sm:$0xff]
      %v259 = vld [vmem:[%s239 + $0x98] sm:$0xff]
      %s260 = sadd.s32 %s194, 3
      %s261 = scalar_lea.vmem %s183, %s260
      %v262 = vld [vmem:[%s261] sm:$0xff]
      %v263 = vld [vmem:[%s261 + $0x8] sm:$0xff]
      %v264 = vld [vmem:[%s261 + $0x10] sm:$0xff]
      %v265 = vld [vmem:[%s261 + $0x18] sm:$0xff]
      %v266 = vld [vmem:[%s261 + $0x20] sm:$0xff]
      %v267 = vld [vmem:[%s261 + $0x28] sm:$0xff]
      %v268 = vld [vmem:[%s261 + $0x30] sm:$0xff]
      %v269 = vld [vmem:[%s261 + $0x38] sm:$0xff]
      %v270 = vld [vmem:[%s261 + $0x40] sm:$0xff]
      %v271 = vld [vmem:[%s261 + $0x48] sm:$0xff]
      %v272 = vld [vmem:[%s261 + $0x50] sm:$0xff]
      %v273 = vld [vmem:[%s261 + $0x58] sm:$0xff]
      %v274 = vld [vmem:[%s261 + $0x60] sm:$0xff]
      %v275 = vld [vmem:[%s261 + $0x68] sm:$0xff]
      %v276 = vld [vmem:[%s261 + $0x70] sm:$0xff]
      %v277 = vld [vmem:[%s261 + $0x78] sm:$0xff]
      %v278 = vld [vmem:[%s261 + $0x80] sm:$0xff]
      %v279 = vld [vmem:[%s261 + $0x88] sm:$0xff]
      %v280 = vld [vmem:[%s261 + $0x90] sm:$0xff]
      %v281 = vld [vmem:[%s261 + $0x98] sm:$0xff]
      %302 = vrot.lane.b32.xlu0 %v218, 64
      %v303 = vpop.permute.xlu0 %302
      %304 = vrot.lane.b32.xlu0 %v219, 64
      %v305 = vpop.permute.xlu0 %304
      %306 = vrot.lane.b32.xlu0 %v220, 64
      %v307 = vpop.permute.xlu0 %306
      %308 = vrot.lane.b32.xlu0 %v221, 64
      %v309 = vpop.permute.xlu0 %308
      %310 = vrot.lane.b32.xlu0 %v222, 64
      %v311 = vpop.permute.xlu0 %310
      %312 = vrot.lane.b32.xlu0 %v223, 64
      %v313 = vpop.permute.xlu0 %312
      %314 = vrot.lane.b32.xlu0 %v224, 64
      %v315 = vpop.permute.xlu0 %314
      %316 = vrot.lane.b32.xlu0 %v225, 64
      %v317 = vpop.permute.xlu0 %316
      %318 = vrot.lane.b32.xlu0 %v226, 64
      %v319 = vpop.permute.xlu0 %318
      %320 = vrot.lane.b32.xlu0 %v227, 64
      %v321 = vpop.permute.xlu0 %320
      %322 = vrot.lane.b32.xlu0 %v228, 64
      %v323 = vpop.permute.xlu0 %322
      %324 = vrot.lane.b32.xlu0 %v229, 64
      %v325 = vpop.permute.xlu0 %324
      %326 = vrot.lane.b32.xlu0 %v230, 64
      %v327 = vpop.permute.xlu0 %326
      %328 = vrot.lane.b32.xlu0 %v231, 64
      %v329 = vpop.permute.xlu0 %328
      %330 = vrot.lane.b32.xlu0 %v232, 64
      %v331 = vpop.permute.xlu0 %330
      %332 = vrot.lane.b32.xlu0 %v233, 64
      %v333 = vpop.permute.xlu0 %332
      %334 = vrot.lane.b32.xlu0 %v234, 64
      %v335 = vpop.permute.xlu0 %334
      %336 = vrot.lane.b32.xlu0 %v235, 64
      %v337 = vpop.permute.xlu0 %336
      %338 = vrot.lane.b32.xlu0 %v236, 64
      %v339 = vpop.permute.xlu0 %338
      %340 = vrot.lane.b32.xlu0 %v237, 64
      %v341 = vpop.permute.xlu0 %340
      %382 = vrot.lane.b32.xlu0 %v262, 64
      %v383 = vpop.permute.xlu0 %382
      %384 = vrot.lane.b32.xlu0 %v263, 64
      %v385 = vpop.permute.xlu0 %384
      %386 = vrot.lane.b32.xlu0 %v264, 64
      %v387 = vpop.permute.xlu0 %386
      %388 = vrot.lane.b32.xlu0 %v265, 64
      %v389 = vpop.permute.xlu0 %388
      %390 = vrot.lane.b32.xlu0 %v266, 64
      %v391 = vpop.permute.xlu0 %390
      %392 = vrot.lane.b32.xlu0 %v267, 64
      %v393 = vpop.permute.xlu0 %392
      %394 = vrot.lane.b32.xlu0 %v268, 64
      %v395 = vpop.permute.xlu0 %394
      %396 = vrot.lane.b32.xlu0 %v269, 64
      %v397 = vpop.permute.xlu0 %396
      %398 = vrot.lane.b32.xlu0 %v270, 64
      %v399 = vpop.permute.xlu0 %398
      %400 = vrot.lane.b32.xlu0 %v271, 64
      %v401 = vpop.permute.xlu0 %400
      %402 = vrot.lane.b32.xlu0 %v272, 64
      %v403 = vpop.permute.xlu0 %402
      %404 = vrot.lane.b32.xlu0 %v273, 64
      %v405 = vpop.permute.xlu0 %404
      %406 = vrot.lane.b32.xlu0 %v274, 64
      %v407 = vpop.permute.xlu0 %406
      %408 = vrot.lane.b32.xlu0 %v275, 64
      %v409 = vpop.permute.xlu0 %408
      %410 = vrot.lane.b32.xlu0 %v276, 64
      %v411 = vpop.permute.xlu0 %410
      %412 = vrot.lane.b32.xlu0 %v277, 64
      %v413 = vpop.permute.xlu0 %412
      %414 = vrot.lane.b32.xlu0 %v278, 64
      %v415 = vpop.permute.xlu0 %414
      %416 = vrot.lane.b32.xlu0 %v279, 64
      %v417 = vpop.permute.xlu0 %416
      %418 = vrot.lane.b32.xlu0 %v280, 64
      %v419 = vpop.permute.xlu0 %418
      %420 = vrot.lane.b32.xlu0 %v281, 64
      %v421 = vpop.permute.xlu0 %420
      %vm442 = vcmask 523264
      %v443 = vsel %vm442, %v196, %v303
      %v444 = vsel %vm442, %v197, %v305
      %v445 = vsel %vm442, %v198, %v307
      %v446 = vsel %vm442, %v199, %v309
      %v447 = vsel %vm442, %v200, %v311
      %v448 = vsel %vm442, %v201, %v313
      %v449 = vsel %vm442, %v202, %v315
      %v450 = vsel %vm442, %v203, %v317
      %v451 = vsel %vm442, %v204, %v319
      %v452 = vsel %vm442, %v205, %v321
      %v453 = vsel %vm442, %v206, %v323
      %v454 = vsel %vm442, %v207, %v325
      %v455 = vsel %vm442, %v208, %v327
      %v456 = vsel %vm442, %v209, %v329
      %v457 = vsel %vm442, %v210, %v331
      %v458 = vsel %vm442, %v211, %v333
      %v459 = vsel %vm442, %v212, %v335
      %v460 = vsel %vm442, %v213, %v337
      %v461 = vsel %vm442, %v214, %v339
      %v462 = vsel %vm442, %v215, %v341
      %v463 = vsel %vm442, %v240, %v383
      %v464 = vsel %vm442, %v241, %v385
      %v465 = vsel %vm442, %v242, %v387
      %v466 = vsel %vm442, %v243, %v389
      %v467 = vsel %vm442, %v244, %v391
      %v468 = vsel %vm442, %v245, %v393
      %v469 = vsel %vm442, %v246, %v395
      %v470 = vsel %vm442, %v247, %v397
      %v471 = vsel %vm442, %v248, %v399
      %v472 = vsel %vm442, %v249, %v401
      %v473 = vsel %vm442, %v250, %v403
      %v474 = vsel %vm442, %v251, %v405
      %v475 = vsel %vm442, %v252, %v407
      %v476 = vsel %vm442, %v253, %v409
      %v477 = vsel %vm442, %v254, %v411
      %v478 = vsel %vm442, %v255, %v413
      %v479 = vsel %vm442, %v256, %v415
      %v480 = vsel %vm442, %v257, %v417
      %v481 = vsel %vm442, %v258, %v419
      %v482 = vsel %vm442, %v259, %v421
      %v483 = vld [vmem:[%s1] sm:$0xff]
      %v484 = vld [vmem:[%s1 + $0x8] sm:$0xff]
      %v485 = vld [vmem:[%s1 + $0x10] sm:$0xff]
      %v486 = vld [vmem:[%s1 + $0x18] sm:$0xff]
      %v487 = vld [vmem:[%s1 + $0x20] sm:$0xff]
      %v488 = vld [vmem:[%s1 + $0x28] sm:$0xff]
      %v489 = vld [vmem:[%s1 + $0x30] sm:$0xff]
      %v490 = vld [vmem:[%s1 + $0x38] sm:$0xff]
      %v491 = vld [vmem:[%s1 + $0x40] sm:$0xff]
      %v492 = vld [vmem:[%s1 + $0x48] sm:$0xff]
      %v493 = vld [vmem:[%s1 + $0x50] sm:$0xff]
      %v494 = vld [vmem:[%s1 + $0x58] sm:$0xff]
      %v495 = vld [vmem:[%s1 + $0x60] sm:$0xff]
      %v496 = vld [vmem:[%s1 + $0x68] sm:$0xff]
      %v497 = vld [vmem:[%s1 + $0x70] sm:$0xff]
      %v498 = vld [vmem:[%s1 + $0x78] sm:$0xff]
      %v499 = vld [vmem:[%s1 + $0x80] sm:$0xff]
      %v500 = vld [vmem:[%s1 + $0x88] sm:$0xff]
      %v501 = vld [vmem:[%s1 + $0x90] sm:$0xff]
      %v502 = vld [vmem:[%s1 + $0x98] sm:$0xff]
      %v503 = vld [vmem:[%s1 + $0xa0] sm:$0xff]
      %v504 = vld [vmem:[%s1 + $0xa8] sm:$0xff]
      %v505 = vld [vmem:[%s1 + $0xb0] sm:$0xff]
      %v506 = vld [vmem:[%s1 + $0xb8] sm:$0xff]
      %v507 = vld [vmem:[%s1 + $0xc0] sm:$0xff]
      %v508 = vld [vmem:[%s1 + $0xc8] sm:$0xff]
      %v509 = vld [vmem:[%s1 + $0xd0] sm:$0xff]
      %v510 = vld [vmem:[%s1 + $0xd8] sm:$0xff]
      %v511 = vld [vmem:[%s1 + $0xe0] sm:$0xff]
      %v512 = vld [vmem:[%s1 + $0xe8] sm:$0xff]
      %v513 = vld [vmem:[%s1 + $0xf0] sm:$0xff]
      %v514 = vld [vmem:[%s1 + $0xf8] sm:$0xff]
      %s515 = sadd.s32 %s194, 4
      %s516 = scalar_lea.vmem %s183, %s515
      %v517 = vld [vmem:[%s516] sm:$0xff]
      %v518 = vld [vmem:[%s516 + $0x8] sm:$0xff]
      %v519 = vld [vmem:[%s516 + $0x10] sm:$0xff]
      %v520 = vld [vmem:[%s516 + $0x18] sm:$0xff]
      %v521 = vld [vmem:[%s516 + $0x20] sm:$0xff]
      %v522 = vld [vmem:[%s516 + $0x28] sm:$0xff]
      %v523 = vld [vmem:[%s516 + $0x30] sm:$0xff]
      %v524 = vld [vmem:[%s516 + $0x38] sm:$0xff]
      %v525 = vld [vmem:[%s516 + $0x40] sm:$0xff]
      %v526 = vld [vmem:[%s516 + $0x48] sm:$0xff]
      %v527 = vld [vmem:[%s516 + $0x50] sm:$0xff]
      %v528 = vld [vmem:[%s516 + $0x58] sm:$0xff]
      %v529 = vld [vmem:[%s516 + $0x60] sm:$0xff]
      %v530 = vld [vmem:[%s516 + $0x68] sm:$0xff]
      %v531 = vld [vmem:[%s516 + $0x70] sm:$0xff]
      %v532 = vld [vmem:[%s516 + $0x78] sm:$0xff]
      %v533 = vld [vmem:[%s516 + $0x80] sm:$0xff]
      %v534 = vld [vmem:[%s516 + $0x88] sm:$0xff]
      %v535 = vld [vmem:[%s516 + $0x90] sm:$0xff]
      %v536 = vld [vmem:[%s516 + $0x98] sm:$0xff]
      %s537 = sadd.s32 %s194, 20
      %s538 = scalar_lea.vmem %s183, %s537
      %v539 = vld [vmem:[%s538] sm:$0xff]
      %v540 = vld [vmem:[%s538 + $0x8] sm:$0xff]
      %v541 = vld [vmem:[%s538 + $0x10] sm:$0xff]
      %v542 = vld [vmem:[%s538 + $0x18] sm:$0xff]
      %v543 = vld [vmem:[%s538 + $0x20] sm:$0xff]
      %v544 = vld [vmem:[%s538 + $0x28] sm:$0xff]
      %v545 = vld [vmem:[%s538 + $0x30] sm:$0xff]
      %v546 = vld [vmem:[%s538 + $0x38] sm:$0xff]
      %v547 = vld [vmem:[%s538 + $0x40] sm:$0xff]
      %v548 = vld [vmem:[%s538 + $0x48] sm:$0xff]
      %v549 = vld [vmem:[%s538 + $0x50] sm:$0xff]
      %v550 = vld [vmem:[%s538 + $0x58] sm:$0xff]
      %v551 = vld [vmem:[%s538 + $0x60] sm:$0xff]
      %v552 = vld [vmem:[%s538 + $0x68] sm:$0xff]
      %v553 = vld [vmem:[%s538 + $0x70] sm:$0xff]
      %v554 = vld [vmem:[%s538 + $0x78] sm:$0xff]
      %v555 = vld [vmem:[%s538 + $0x80] sm:$0xff]
      %v556 = vld [vmem:[%s538 + $0x88] sm:$0xff]
      %v557 = vld [vmem:[%s538 + $0x90] sm:$0xff]
      %v558 = vld [vmem:[%s538 + $0x98] sm:$0xff]
      %s559 = sadd.s32 %s194, 21
      %s560 = scalar_lea.vmem %s183, %s559
      %v561 = vld [vmem:[%s560] sm:$0xff]
      %v562 = vld [vmem:[%s560 + $0x8] sm:$0xff]
      %v563 = vld [vmem:[%s560 + $0x10] sm:$0xff]
      %v564 = vld [vmem:[%s560 + $0x18] sm:$0xff]
      %v565 = vld [vmem:[%s560 + $0x20] sm:$0xff]
      %v566 = vld [vmem:[%s560 + $0x28] sm:$0xff]
      %v567 = vld [vmem:[%s560 + $0x30] sm:$0xff]
      %v568 = vld [vmem:[%s560 + $0x38] sm:$0xff]
      %v569 = vld [vmem:[%s560 + $0x40] sm:$0xff]
      %v570 = vld [vmem:[%s560 + $0x48] sm:$0xff]
      %v571 = vld [vmem:[%s560 + $0x50] sm:$0xff]
      %v572 = vld [vmem:[%s560 + $0x58] sm:$0xff]
      %v573 = vld [vmem:[%s560 + $0x60] sm:$0xff]
      %v574 = vld [vmem:[%s560 + $0x68] sm:$0xff]
      %v575 = vld [vmem:[%s560 + $0x70] sm:$0xff]
      %v576 = vld [vmem:[%s560 + $0x78] sm:$0xff]
      %v577 = vld [vmem:[%s560 + $0x80] sm:$0xff]
      %v578 = vld [vmem:[%s560 + $0x88] sm:$0xff]
      %v579 = vld [vmem:[%s560 + $0x90] sm:$0xff]
      %v580 = vld [vmem:[%s560 + $0x98] sm:$0xff]
      %s581 = sadd.s32 %s194, 22
      %s582 = scalar_lea.vmem %s183, %s581
      %v583 = vld [vmem:[%s582] sm:$0xff]
      %v584 = vld [vmem:[%s582 + $0x8] sm:$0xff]
      %v585 = vld [vmem:[%s582 + $0x10] sm:$0xff]
      %v586 = vld [vmem:[%s582 + $0x18] sm:$0xff]
      %v587 = vld [vmem:[%s582 + $0x20] sm:$0xff]
      %v588 = vld [vmem:[%s582 + $0x28] sm:$0xff]
      %v589 = vld [vmem:[%s582 + $0x30] sm:$0xff]
      %v590 = vld [vmem:[%s582 + $0x38] sm:$0xff]
      %v591 = vld [vmem:[%s582 + $0x40] sm:$0xff]
      %v592 = vld [vmem:[%s582 + $0x48] sm:$0xff]
      %v593 = vld [vmem:[%s582 + $0x50] sm:$0xff]
      %v594 = vld [vmem:[%s582 + $0x58] sm:$0xff]
      %v595 = vld [vmem:[%s582 + $0x60] sm:$0xff]
      %v596 = vld [vmem:[%s582 + $0x68] sm:$0xff]
      %v597 = vld [vmem:[%s582 + $0x70] sm:$0xff]
      %v598 = vld [vmem:[%s582 + $0x78] sm:$0xff]
      %v599 = vld [vmem:[%s582 + $0x80] sm:$0xff]
      %v600 = vld [vmem:[%s582 + $0x88] sm:$0xff]
      %v601 = vld [vmem:[%s582 + $0x90] sm:$0xff]
      %v602 = vld [vmem:[%s582 + $0x98] sm:$0xff]
      %623 = vrot.lane.b32.xlu0 %v539, 64
      %v624 = vpop.permute.xlu0 %623
      %625 = vrot.lane.b32.xlu0 %v540, 64
      %v626 = vpop.permute.xlu0 %625
      %627 = vrot.lane.b32.xlu0 %v541, 64
      %v628 = vpop.permute.xlu0 %627
      %629 = vrot.lane.b32.xlu0 %v542, 64
      %v630 = vpop.permute.xlu0 %629
      %631 = vrot.lane.b32.xlu0 %v543, 64
      %v632 = vpop.permute.xlu0 %631
      %633 = vrot.lane.b32.xlu0 %v544, 64
      %v634 = vpop.permute.xlu0 %633
      %635 = vrot.lane.b32.xlu0 %v545, 64
      %v636 = vpop.permute.xlu0 %635
      %637 = vrot.lane.b32.xlu0 %v546, 64
      %v638 = vpop.permute.xlu0 %637
      %639 = vrot.lane.b32.xlu0 %v547, 64
      %v640 = vpop.permute.xlu0 %639
      %641 = vrot.lane.b32.xlu0 %v548, 64
      %v642 = vpop.permute.xlu0 %641
      %643 = vrot.lane.b32.xlu0 %v549, 64
      %v644 = vpop.permute.xlu0 %643
      %645 = vrot.lane.b32.xlu0 %v550, 64
      %v646 = vpop.permute.xlu0 %645
      %647 = vrot.lane.b32.xlu0 %v551, 64
      %v648 = vpop.permute.xlu0 %647
      %649 = vrot.lane.b32.xlu0 %v552, 64
      %v650 = vpop.permute.xlu0 %649
      %651 = vrot.lane.b32.xlu0 %v553, 64
      %v652 = vpop.permute.xlu0 %651
      %653 = vrot.lane.b32.xlu0 %v554, 64
      %v654 = vpop.permute.xlu0 %653
      %655 = vrot.lane.b32.xlu0 %v555, 64
      %v656 = vpop.permute.xlu0 %655
      %657 = vrot.lane.b32.xlu0 %v556, 64
      %v658 = vpop.permute.xlu0 %657
      %659 = vrot.lane.b32.xlu0 %v557, 64
      %v660 = vpop.permute.xlu0 %659
      %661 = vrot.lane.b32.xlu0 %v558, 64
      %v662 = vpop.permute.xlu0 %661
      %703 = vrot.lane.b32.xlu0 %v583, 64
      %v704 = vpop.permute.xlu0 %703
      %705 = vrot.lane.b32.xlu0 %v584, 64
      %v706 = vpop.permute.xlu0 %705
      %707 = vrot.lane.b32.xlu0 %v585, 64
      %v708 = vpop.permute.xlu0 %707
      %709 = vrot.lane.b32.xlu0 %v586, 64
      %v710 = vpop.permute.xlu0 %709
      %711 = vrot.lane.b32.xlu0 %v587, 64
      %v712 = vpop.permute.xlu0 %711
      %713 = vrot.lane.b32.xlu0 %v588, 64
      %v714 = vpop.permute.xlu0 %713
      %715 = vrot.lane.b32.xlu0 %v589, 64
      %v716 = vpop.permute.xlu0 %715
      %717 = vrot.lane.b32.xlu0 %v590, 64
      %v718 = vpop.permute.xlu0 %717
      %719 = vrot.lane.b32.xlu0 %v591, 64
      %v720 = vpop.permute.xlu0 %719
      %721 = vrot.lane.b32.xlu0 %v592, 64
      %v722 = vpop.permute.xlu0 %721
      %723 = vrot.lane.b32.xlu0 %v593, 64
      %v724 = vpop.permute.xlu0 %723
      %725 = vrot.lane.b32.xlu0 %v594, 64
      %v726 = vpop.permute.xlu0 %725
      %727 = vrot.lane.b32.xlu0 %v595, 64
      %v728 = vpop.permute.xlu0 %727
      %729 = vrot.lane.b32.xlu0 %v596, 64
      %v730 = vpop.permute.xlu0 %729
      %731 = vrot.lane.b32.xlu0 %v597, 64
      %v732 = vpop.permute.xlu0 %731
      %733 = vrot.lane.b32.xlu0 %v598, 64
      %v734 = vpop.permute.xlu0 %733
      %735 = vrot.lane.b32.xlu0 %v599, 64
      %v736 = vpop.permute.xlu0 %735
      %737 = vrot.lane.b32.xlu0 %v600, 64
      %v738 = vpop.permute.xlu0 %737
      %739 = vrot.lane.b32.xlu0 %v601, 64
      %v740 = vpop.permute.xlu0 %739
      %741 = vrot.lane.b32.xlu0 %v602, 64
      %v742 = vpop.permute.xlu0 %741
      %v763 = vsel %vm442, %v517, %v624
      %v764 = vsel %vm442, %v518, %v626
      %v765 = vsel %vm442, %v519, %v628
      %v766 = vsel %vm442, %v520, %v630
      %v767 = vsel %vm442, %v521, %v632
      %v768 = vsel %vm442, %v522, %v634
      %v769 = vsel %vm442, %v523, %v636
      %v770 = vsel %vm442, %v524, %v638
      %v771 = vsel %vm442, %v525, %v640
      %v772 = vsel %vm442, %v526, %v642
      %v773 = vsel %vm442, %v527, %v644
      %v774 = vsel %vm442, %v528, %v646
      %v775 = vsel %vm442, %v529, %v648
      %v776 = vsel %vm442, %v530, %v650
      %v777 = vsel %vm442, %v531, %v652
      %v778 = vsel %vm442, %v532, %v654
      %v779 = vsel %vm442, %v533, %v656
      %v780 = vsel %vm442, %v534, %v658
      %v781 = vsel %vm442, %v535, %v660
      %v782 = vsel %vm442, %v536, %v662
      %v783 = vsel %vm442, %v561, %v704
      %v784 = vsel %vm442, %v562, %v706
      %v785 = vsel %vm442, %v563, %v708
      %v786 = vsel %vm442, %v564, %v710
      %v787 = vsel %vm442, %v565, %v712
      %v788 = vsel %vm442, %v566, %v714
      %v789 = vsel %vm442, %v567, %v716
      %v790 = vsel %vm442, %v568, %v718
      %v791 = vsel %vm442, %v569, %v720
      %v792 = vsel %vm442, %v570, %v722
      %v793 = vsel %vm442, %v571, %v724
      %v794 = vsel %vm442, %v572, %v726
      %v795 = vsel %vm442, %v573, %v728
      %v796 = vsel %vm442, %v574, %v730
      %v797 = vsel %vm442, %v575, %v732
      %v798 = vsel %vm442, %v576, %v734
      %v799 = vsel %vm442, %v577, %v736
      %v800 = vsel %vm442, %v578, %v738
      %v801 = vsel %vm442, %v579, %v740
      %v802 = vsel %vm442, %v580, %v742
      %s803 = scalar_lea.vmem %s1, 256
      %v804 = vld [vmem:[%s803] sm:$0xff]
      %v805 = vld [vmem:[%s803 + $0x8] sm:$0xff]
      %v806 = vld [vmem:[%s803 + $0x10] sm:$0xff]
      %v807 = vld [vmem:[%s803 + $0x18] sm:$0xff]
      %v808 = vld [vmem:[%s803 + $0x20] sm:$0xff]
      %v809 = vld [vmem:[%s803 + $0x28] sm:$0xff]
      %v810 = vld [vmem:[%s803 + $0x30] sm:$0xff]
      %v811 = vld [vmem:[%s803 + $0x38] sm:$0xff]
      %v812 = vld [vmem:[%s803 + $0x40] sm:$0xff]
      %v813 = vld [vmem:[%s803 + $0x48] sm:$0xff]
      %v814 = vld [vmem:[%s803 + $0x50] sm:$0xff]
      %v815 = vld [vmem:[%s803 + $0x58] sm:$0xff]
      %v816 = vld [vmem:[%s803 + $0x60] sm:$0xff]
      %v817 = vld [vmem:[%s803 + $0x68] sm:$0xff]
      %v818 = vld [vmem:[%s803 + $0x70] sm:$0xff]
      %v819 = vld [vmem:[%s803 + $0x78] sm:$0xff]
      %v820 = vld [vmem:[%s803 + $0x80] sm:$0xff]
      %v821 = vld [vmem:[%s803 + $0x88] sm:$0xff]
      %v822 = vld [vmem:[%s803 + $0x90] sm:$0xff]
      %v823 = vld [vmem:[%s803 + $0x98] sm:$0xff]
      %v824 = vld [vmem:[%s803 + $0xa0] sm:$0xff]
      %v825 = vld [vmem:[%s803 + $0xa8] sm:$0xff]
      %v826 = vld [vmem:[%s803 + $0xb0] sm:$0xff]
      %v827 = vld [vmem:[%s803 + $0xb8] sm:$0xff]
      %v828 = vld [vmem:[%s803 + $0xc0] sm:$0xff]
      %v829 = vld [vmem:[%s803 + $0xc8] sm:$0xff]
      %v830 = vld [vmem:[%s803 + $0xd0] sm:$0xff]
      %v831 = vld [vmem:[%s803 + $0xd8] sm:$0xff]
      %v832 = vld [vmem:[%s803 + $0xe0] sm:$0xff]
      %v833 = vld [vmem:[%s803 + $0xe8] sm:$0xff]
      %v834 = vld [vmem:[%s803 + $0xf0] sm:$0xff]
      %v835 = vld [vmem:[%s803 + $0xf8] sm:$0xff]
      %836 = vmatpush.msra.mxu0 %v819
      %837 = vmatpush.msra.mxu0 %v818
      %838 = vmatpush.msra.mxu0 %v817
      %839 = vmatpush.msra.mxu0 %v816
      %840 = vmatpush.msra.mxu0 %v815
      %841 = vmatpush.msra.mxu0 %v814
      %842 = vmatpush.msra.mxu0 %v813
      %843 = vmatpush.msra.mxu0 %v812
      %844 = vmatpush.msra.mxu0 %v811
      %845 = vmatpush.msra.mxu0 %v810
      %846 = vmatpush.msra.mxu0 %v809
      %847 = vmatpush.msra.mxu0 %v808
      %848 = vmatpush.msra.mxu0 %v807
      %849 = vmatpush.msra.mxu0 %v806
      %850 = vmatpush.msra.mxu0 %v805
      %851 = vmatpush.msra.mxu0 %v804
      %852 = vmatmul.f32.gmra.mxu0 %v763
      %v853 = vpop.f32.mrf.mxu0
      %v854 = vadd.f32 0.0, %v853
      %855 = vmatmul.f32.gmra.mxu0 %v764
      %v856 = vpop.f32.mrf.mxu0
      %v857 = vadd.f32 0.0, %v856
      %858 = vmatmul.f32.gmra.mxu0 %v765
      %v859 = vpop.f32.mrf.mxu0
      %v860 = vadd.f32 0.0, %v859
      %861 = vmatmul.f32.gmra.mxu0 %v766
      %v862 = vpop.f32.mrf.mxu0
      %v863 = vadd.f32 0.0, %v862
      %864 = vmatmul.f32.gmra.mxu0 %v767
      %v865 = vpop.f32.mrf.mxu0
      %v866 = vadd.f32 0.0, %v865
      %867 = vmatmul.f32.gmra.mxu0 %v768
      %v868 = vpop.f32.mrf.mxu0
      %v869 = vadd.f32 0.0, %v868
      %870 = vmatmul.f32.gmra.mxu0 %v769
      %v871 = vpop.f32.mrf.mxu0
      %v872 = vadd.f32 0.0, %v871
      %873 = vmatmul.f32.gmra.mxu0 %v770
      %v874 = vpop.f32.mrf.mxu0
      %v875 = vadd.f32 0.0, %v874
      %876 = vmatmul.f32.gmra.mxu0 %v771
      %v877 = vpop.f32.mrf.mxu0
      %v878 = vadd.f32 0.0, %v877
      %879 = vmatmul.f32.gmra.mxu0 %v772
      %v880 = vpop.f32.mrf.mxu0
      %v881 = vadd.f32 0.0, %v880
      %882 = vmatmul.f32.gmra.mxu0 %v773
      %v883 = vpop.f32.mrf.mxu0
      %v884 = vadd.f32 0.0, %v883
      %885 = vmatmul.f32.gmra.mxu0 %v774
      %v886 = vpop.f32.mrf.mxu0
      %v887 = vadd.f32 0.0, %v886
      %888 = vmatmul.f32.gmra.mxu0 %v775
      %v889 = vpop.f32.mrf.mxu0
      %v890 = vadd.f32 0.0, %v889
      %891 = vmatmul.f32.gmra.mxu0 %v776
      %v892 = vpop.f32.mrf.mxu0
      %v893 = vadd.f32 0.0, %v892
      %894 = vmatmul.f32.gmra.mxu0 %v777
      %v895 = vpop.f32.mrf.mxu0
      %v896 = vadd.f32 0.0, %v895
      %897 = vmatmul.f32.gmra.mxu0 %v778
      %v898 = vpop.f32.mrf.mxu0
      %v899 = vadd.f32 0.0, %v898
      %900 = vmatmul.f32.gmra.mxu0 %v779
      %v901 = vpop.f32.mrf.mxu0
      %v902 = vadd.f32 0.0, %v901
      %903 = vmatmul.f32.gmra.mxu0 %v780
      %v904 = vpop.f32.mrf.mxu0
      %v905 = vadd.f32 0.0, %v904
      %906 = vmatmul.f32.gmra.mxu0 %v781
      %v907 = vpop.f32.mrf.mxu0
      %v908 = vadd.f32 0.0, %v907
      %909 = vmatmul.f32.gmra.mxu0 %v782
      %v910 = vpop.f32.mrf.mxu0
      %v911 = vadd.f32 0.0, %v910
      %912 = vdwg.mxu0
      %913 = vmatpush.msra.mxu0 %v835
      %914 = vmatpush.msra.mxu0 %v834
      %915 = vmatpush.msra.mxu0 %v833
      %916 = vmatpush.msra.mxu0 %v832
      %917 = vmatpush.msra.mxu0 %v831
      %918 = vmatpush.msra.mxu0 %v830
      %919 = vmatpush.msra.mxu0 %v829
      %920 = vmatpush.msra.mxu0 %v828
      %921 = vmatpush.msra.mxu0 %v827
      %922 = vmatpush.msra.mxu0 %v826
      %923 = vmatpush.msra.mxu0 %v825
      %924 = vmatpush.msra.mxu0 %v824
      %925 = vmatpush.msra.mxu0 %v823
      %926 = vmatpush.msra.mxu0 %v822
      %927 = vmatpush.msra.mxu0 %v821
      %928 = vmatpush.msra.mxu0 %v820
      %929 = vmatmul.f32.gmra.mxu0 %v783
      %v930 = vpop.f32.mrf.mxu0
      %v931 = vadd.f32 %v854, %v930
      %932 = vmatmul.f32.gmra.mxu0 %v784
      %v933 = vpop.f32.mrf.mxu0
      %v934 = vadd.f32 %v857, %v933
      %935 = vmatmul.f32.gmra.mxu0 %v785
      %v936 = vpop.f32.mrf.mxu0
      %v937 = vadd.f32 %v860, %v936
      %938 = vmatmul.f32.gmra.mxu0 %v786
      %v939 = vpop.f32.mrf.mxu0
      %v940 = vadd.f32 %v863, %v939
      %941 = vmatmul.f32.gmra.mxu0 %v787
      %v942 = vpop.f32.mrf.mxu0
      %v943 = vadd.f32 %v866, %v942
      %944 = vmatmul.f32.gmra.mxu0 %v788
      %v945 = vpop.f32.mrf.mxu0
      %v946 = vadd.f32 %v869, %v945
      %947 = vmatmul.f32.gmra.mxu0 %v789
      %v948 = vpop.f32.mrf.mxu0
      %v949 = vadd.f32 %v872, %v948
      %950 = vmatmul.f32.gmra.mxu0 %v790
      %v951 = vpop.f32.mrf.mxu0
      %v952 = vadd.f32 %v875, %v951
      %953 = vmatmul.f32.gmra.mxu0 %v791
      %v954 = vpop.f32.mrf.mxu0
      %v955 = vadd.f32 %v878, %v954
      %956 = vmatmul.f32.gmra.mxu0 %v792
      %v957 = vpop.f32.mrf.mxu0
      %v958 = vadd.f32 %v881, %v957
      %959 = vmatmul.f32.gmra.mxu0 %v793
      %v960 = vpop.f32.mrf.mxu0
      %v961 = vadd.f32 %v884, %v960
      %962 = vmatmul.f32.gmra.mxu0 %v794
      %v963 = vpop.f32.mrf.mxu0
      %v964 = vadd.f32 %v887, %v963
      %965 = vmatmul.f32.gmra.mxu0 %v795
      %v966 = vpop.f32.mrf.mxu0
      %v967 = vadd.f32 %v890, %v966
      %968 = vmatmul.f32.gmra.mxu0 %v796
      %v969 = vpop.f32.mrf.mxu0
      %v970 = vadd.f32 %v893, %v969
      %971 = vmatmul.f32.gmra.mxu0 %v797
      %v972 = vpop.f32.mrf.mxu0
      %v973 = vadd.f32 %v896, %v972
      %974 = vmatmul.f32.gmra.mxu0 %v798
      %v975 = vpop.f32.mrf.mxu0
      %v976 = vadd.f32 %v899, %v975
      %977 = vmatmul.f32.gmra.mxu0 %v799
      %v978 = vpop.f32.mrf.mxu0
      %v979 = vadd.f32 %v902, %v978
      %980 = vmatmul.f32.gmra.mxu0 %v800
      %v981 = vpop.f32.mrf.mxu0
      %v982 = vadd.f32 %v905, %v981
      %983 = vmatmul.f32.gmra.mxu0 %v801
      %v984 = vpop.f32.mrf.mxu0
      %v985 = vadd.f32 %v908, %v984
      %986 = vmatmul.f32.gmra.mxu0 %v802
      %v987 = vpop.f32.mrf.mxu0
      %v988 = vadd.f32 %v911, %v987
      %989 = vdwg.mxu0
      %990 = vmatpush.msra.mxu0 %v498
      %991 = vmatpush.msra.mxu0 %v497
      %992 = vmatpush.msra.mxu0 %v496
      %993 = vmatpush.msra.mxu0 %v495
      %994 = vmatpush.msra.mxu0 %v494
      %995 = vmatpush.msra.mxu0 %v493
      %996 = vmatpush.msra.mxu0 %v492
      %997 = vmatpush.msra.mxu0 %v491
      %998 = vmatpush.msra.mxu0 %v490
      %999 = vmatpush.msra.mxu0 %v489
      %1000 = vmatpush.msra.mxu0 %v488
      %1001 = vmatpush.msra.mxu0 %v487
      %1002 = vmatpush.msra.mxu0 %v486
      %1003 = vmatpush.msra.mxu0 %v485
      %1004 = vmatpush.msra.mxu0 %v484
      %1005 = vmatpush.msra.mxu0 %v483
      %1006 = vmatmul.f32.gmra.mxu0 %v443
      %v1007 = vpop.f32.mrf.mxu0
      %v1008 = vadd.f32 %v931, %v1007
      %1009 = vmatmul.f32.gmra.mxu0 %v444
      %v1010 = vpop.f32.mrf.mxu0
      %v1011 = vadd.f32 %v934, %v1010
      %1012 = vmatmul.f32.gmra.mxu0 %v445
      %v1013 = vpop.f32.mrf.mxu0
      %v1014 = vadd.f32 %v937, %v1013
      %1015 = vmatmul.f32.gmra.mxu0 %v446
      %v1016 = vpop.f32.mrf.mxu0
      %v1017 = vadd.f32 %v940, %v1016
      %1018 = vmatmul.f32.gmra.mxu0 %v447
      %v1019 = vpop.f32.mrf.mxu0
      %v1020 = vadd.f32 %v943, %v1019
      %1021 = vmatmul.f32.gmra.mxu0 %v448
      %v1022 = vpop.f32.mrf.mxu0
      %v1023 = vadd.f32 %v946, %v1022
      %1024 = vmatmul.f32.gmra.mxu0 %v449
      %v1025 = vpop.f32.mrf.mxu0
      %v1026 = vadd.f32 %v949, %v1025
      %1027 = vmatmul.f32.gmra.mxu0 %v450
      %v1028 = vpop.f32.mrf.mxu0
      %v1029 = vadd.f32 %v952, %v1028
      %1030 = vmatmul.f32.gmra.mxu0 %v451
      %v1031 = vpop.f32.mrf.mxu0
      %v1032 = vadd.f32 %v955, %v1031
      %1033 = vmatmul.f32.gmra.mxu0 %v452
      %v1034 = vpop.f32.mrf.mxu0
      %v1035 = vadd.f32 %v958, %v1034
      %1036 = vmatmul.f32.gmra.mxu0 %v453
      %v1037 = vpop.f32.mrf.mxu0
      %v1038 = vadd.f32 %v961, %v1037
      %1039 = vmatmul.f32.gmra.mxu0 %v454
      %v1040 = vpop.f32.mrf.mxu0
      %v1041 = vadd.f32 %v964, %v1040
      %1042 = vmatmul.f32.gmra.mxu0 %v455
      %v1043 = vpop.f32.mrf.mxu0
      %v1044 = vadd.f32 %v967, %v1043
      %1045 = vmatmul.f32.gmra.mxu0 %v456
      %v1046 = vpop.f32.mrf.mxu0
      %v1047 = vadd.f32 %v970, %v1046
      %1048 = vmatmul.f32.gmra.mxu0 %v457
      %v1049 = vpop.f32.mrf.mxu0
      %v1050 = vadd.f32 %v973, %v1049
      %1051 = vmatmul.f32.gmra.mxu0 %v458
      %v1052 = vpop.f32.mrf.mxu0
      %v1053 = vadd.f32 %v976, %v1052
      %1054 = vmatmul.f32.gmra.mxu0 %v459
      %v1055 = vpop.f32.mrf.mxu0
      %v1056 = vadd.f32 %v979, %v1055
      %1057 = vmatmul.f32.gmra.mxu0 %v460
      %v1058 = vpop.f32.mrf.mxu0
      %v1059 = vadd.f32 %v982, %v1058
      %1060 = vmatmul.f32.gmra.mxu0 %v461
      %v1061 = vpop.f32.mrf.mxu0
      %v1062 = vadd.f32 %v985, %v1061
      %1063 = vmatmul.f32.gmra.mxu0 %v462
      %v1064 = vpop.f32.mrf.mxu0
      %v1065 = vadd.f32 %v988, %v1064
      %1066 = vdwg.mxu0
      %1067 = vmatpush.msra.mxu0 %v514
      %1068 = vmatpush.msra.mxu0 %v513
      %1069 = vmatpush.msra.mxu0 %v512
      %1070 = vmatpush.msra.mxu0 %v511
      %1071 = vmatpush.msra.mxu0 %v510
      %1072 = vmatpush.msra.mxu0 %v509
      %1073 = vmatpush.msra.mxu0 %v508
      %1074 = vmatpush.msra.mxu0 %v507
      %1075 = vmatpush.msra.mxu0 %v506
      %1076 = vmatpush.msra.mxu0 %v505
      %1077 = vmatpush.msra.mxu0 %v504
      %1078 = vmatpush.msra.mxu0 %v503
      %1079 = vmatpush.msra.mxu0 %v502
      %1080 = vmatpush.msra.mxu0 %v501
      %1081 = vmatpush.msra.mxu0 %v500
      %1082 = vmatpush.msra.mxu0 %v499
      %1083 = vmatmul.f32.gmra.mxu0 %v463
      %v1084 = vpop.f32.mrf.mxu0
      %v1085 = vadd.f32 %v1008, %v1084
      %1086 = vmatmul.f32.gmra.mxu0 %v464
      %v1087 = vpop.f32.mrf.mxu0
      %v1088 = vadd.f32 %v1011, %v1087
      %1089 = vmatmul.f32.gmra.mxu0 %v465
      %v1090 = vpop.f32.mrf.mxu0
      %v1091 = vadd.f32 %v1014, %v1090
      %1092 = vmatmul.f32.gmra.mxu0 %v466
      %v1093 = vpop.f32.mrf.mxu0
      %v1094 = vadd.f32 %v1017, %v1093
      %1095 = vmatmul.f32.gmra.mxu0 %v467
      %v1096 = vpop.f32.mrf.mxu0
      %v1097 = vadd.f32 %v1020, %v1096
      %1098 = vmatmul.f32.gmra.mxu0 %v468
      %v1099 = vpop.f32.mrf.mxu0
      %v1100 = vadd.f32 %v1023, %v1099
      %1101 = vmatmul.f32.gmra.mxu0 %v469
      %v1102 = vpop.f32.mrf.mxu0
      %v1103 = vadd.f32 %v1026, %v1102
      %1104 = vmatmul.f32.gmra.mxu0 %v470
      %v1105 = vpop.f32.mrf.mxu0
      %v1106 = vadd.f32 %v1029, %v1105
      %1107 = vmatmul.f32.gmra.mxu0 %v471
      %v1108 = vpop.f32.mrf.mxu0
      %v1109 = vadd.f32 %v1032, %v1108
      %1110 = vmatmul.f32.gmra.mxu0 %v472
      %v1111 = vpop.f32.mrf.mxu0
      %v1112 = vadd.f32 %v1035, %v1111
      %1113 = vmatmul.f32.gmra.mxu0 %v473
      %v1114 = vpop.f32.mrf.mxu0
      %v1115 = vadd.f32 %v1038, %v1114
      %1116 = vmatmul.f32.gmra.mxu0 %v474
      %v1117 = vpop.f32.mrf.mxu0
      %v1118 = vadd.f32 %v1041, %v1117
      %1119 = vmatmul.f32.gmra.mxu0 %v475
      %v1120 = vpop.f32.mrf.mxu0
      %v1121 = vadd.f32 %v1044, %v1120
      %1122 = vmatmul.f32.gmra.mxu0 %v476
      %v1123 = vpop.f32.mrf.mxu0
      %v1124 = vadd.f32 %v1047, %v1123
      %1125 = vmatmul.f32.gmra.mxu0 %v477
      %v1126 = vpop.f32.mrf.mxu0
      %v1127 = vadd.f32 %v1050, %v1126
      %1128 = vmatmul.f32.gmra.mxu0 %v478
      %v1129 = vpop.f32.mrf.mxu0
      %v1130 = vadd.f32 %v1053, %v1129
      %1131 = vmatmul.f32.gmra.mxu0 %v479
      %v1132 = vpop.f32.mrf.mxu0
      %v1133 = vadd.f32 %v1056, %v1132
      %1134 = vmatmul.f32.gmra.mxu0 %v480
      %v1135 = vpop.f32.mrf.mxu0
      %v1136 = vadd.f32 %v1059, %v1135
      %1137 = vmatmul.f32.gmra.mxu0 %v481
      %v1138 = vpop.f32.mrf.mxu0
      %v1139 = vadd.f32 %v1062, %v1138
      %1140 = vmatmul.f32.gmra.mxu0 %v482
      %v1141 = vpop.f32.mrf.mxu0
      %v1142 = vadd.f32 %v1065, %v1141
      %1143 = vdwg.mxu0
      %s1144 = sadd.s32 %s194, 23
      %s1145 = scalar_lea.vmem %s183, %s1144
      %v1146 = vld [vmem:[%s1145] sm:$0xff]
      %v1147 = vld [vmem:[%s1145 + $0x8] sm:$0xff]
      %v1148 = vld [vmem:[%s1145 + $0x10] sm:$0xff]
      %v1149 = vld [vmem:[%s1145 + $0x18] sm:$0xff]
      %v1150 = vld [vmem:[%s1145 + $0x20] sm:$0xff]
      %v1151 = vld [vmem:[%s1145 + $0x28] sm:$0xff]
      %v1152 = vld [vmem:[%s1145 + $0x30] sm:$0xff]
      %v1153 = vld [vmem:[%s1145 + $0x38] sm:$0xff]
      %v1154 = vld [vmem:[%s1145 + $0x40] sm:$0xff]
      %v1155 = vld [vmem:[%s1145 + $0x48] sm:$0xff]
      %v1156 = vld [vmem:[%s1145 + $0x50] sm:$0xff]
      %v1157 = vld [vmem:[%s1145 + $0x58] sm:$0xff]
      %v1158 = vld [vmem:[%s1145 + $0x60] sm:$0xff]
      %v1159 = vld [vmem:[%s1145 + $0x68] sm:$0xff]
      %v1160 = vld [vmem:[%s1145 + $0x70] sm:$0xff]
      %v1161 = vld [vmem:[%s1145 + $0x78] sm:$0xff]
      %v1162 = vld [vmem:[%s1145 + $0x80] sm:$0xff]
      %v1163 = vld [vmem:[%s1145 + $0x88] sm:$0xff]
      %v1164 = vld [vmem:[%s1145 + $0x90] sm:$0xff]
      %v1165 = vld [vmem:[%s1145 + $0x98] sm:$0xff]
      %s1166 = sadd.s32 %s194, 24
      %s1167 = scalar_lea.vmem %s183, %s1166
      %v1168 = vld [vmem:[%s1167] sm:$0xff]
      %v1169 = vld [vmem:[%s1167 + $0x8] sm:$0xff]
      %v1170 = vld [vmem:[%s1167 + $0x10] sm:$0xff]
      %v1171 = vld [vmem:[%s1167 + $0x18] sm:$0xff]
      %v1172 = vld [vmem:[%s1167 + $0x20] sm:$0xff]
      %v1173 = vld [vmem:[%s1167 + $0x28] sm:$0xff]
      %v1174 = vld [vmem:[%s1167 + $0x30] sm:$0xff]
      %v1175 = vld [vmem:[%s1167 + $0x38] sm:$0xff]
      %v1176 = vld [vmem:[%s1167 + $0x40] sm:$0xff]
      %v1177 = vld [vmem:[%s1167 + $0x48] sm:$0xff]
      %v1178 = vld [vmem:[%s1167 + $0x50] sm:$0xff]
      %v1179 = vld [vmem:[%s1167 + $0x58] sm:$0xff]
      %v1180 = vld [vmem:[%s1167 + $0x60] sm:$0xff]
      %v1181 = vld [vmem:[%s1167 + $0x68] sm:$0xff]
      %v1182 = vld [vmem:[%s1167 + $0x70] sm:$0xff]
      %v1183 = vld [vmem:[%s1167 + $0x78] sm:$0xff]
      %v1184 = vld [vmem:[%s1167 + $0x80] sm:$0xff]
      %v1185 = vld [vmem:[%s1167 + $0x88] sm:$0xff]
      %v1186 = vld [vmem:[%s1167 + $0x90] sm:$0xff]
      %v1187 = vld [vmem:[%s1167 + $0x98] sm:$0xff]
      %s1188 = sadd.s32 %s194, 40
      %s1189 = scalar_lea.vmem %s183, %s1188
      %v1190 = vld [vmem:[%s1189] sm:$0xff]
      %v1191 = vld [vmem:[%s1189 + $0x8] sm:$0xff]
      %v1192 = vld [vmem:[%s1189 + $0x10] sm:$0xff]
      %v1193 = vld [vmem:[%s1189 + $0x18] sm:$0xff]
      %v1194 = vld [vmem:[%s1189 + $0x20] sm:$0xff]
      %v1195 = vld [vmem:[%s1189 + $0x28] sm:$0xff]
      %v1196 = vld [vmem:[%s1189 + $0x30] sm:$0xff]
      %v1197 = vld [vmem:[%s1189 + $0x38] sm:$0xff]
      %v1198 = vld [vmem:[%s1189 + $0x40] sm:$0xff]
      %v1199 = vld [vmem:[%s1189 + $0x48] sm:$0xff]
      %v1200 = vld [vmem:[%s1189 + $0x50] sm:$0xff]
      %v1201 = vld [vmem:[%s1189 + $0x58] sm:$0xff]
      %v1202 = vld [vmem:[%s1189 + $0x60] sm:$0xff]
      %v1203 = vld [vmem:[%s1189 + $0x68] sm:$0xff]
      %v1204 = vld [vmem:[%s1189 + $0x70] sm:$0xff]
      %v1205 = vld [vmem:[%s1189 + $0x78] sm:$0xff]
      %v1206 = vld [vmem:[%s1189 + $0x80] sm:$0xff]
      %v1207 = vld [vmem:[%s1189 + $0x88] sm:$0xff]
      %v1208 = vld [vmem:[%s1189 + $0x90] sm:$0xff]
      %v1209 = vld [vmem:[%s1189 + $0x98] sm:$0xff]
      %s1210 = sadd.s32 %s194, 41
      %s1211 = scalar_lea.vmem %s183, %s1210
      %v1212 = vld [vmem:[%s1211] sm:$0xff]
      %v1213 = vld [vmem:[%s1211 + $0x8] sm:$0xff]
      %v1214 = vld [vmem:[%s1211 + $0x10] sm:$0xff]
      %v1215 = vld [vmem:[%s1211 + $0x18] sm:$0xff]
      %v1216 = vld [vmem:[%s1211 + $0x20] sm:$0xff]
      %v1217 = vld [vmem:[%s1211 + $0x28] sm:$0xff]
      %v1218 = vld [vmem:[%s1211 + $0x30] sm:$0xff]
      %v1219 = vld [vmem:[%s1211 + $0x38] sm:$0xff]
      %v1220 = vld [vmem:[%s1211 + $0x40] sm:$0xff]
      %v1221 = vld [vmem:[%s1211 + $0x48] sm:$0xff]
      %v1222 = vld [vmem:[%s1211 + $0x50] sm:$0xff]
      %v1223 = vld [vmem:[%s1211 + $0x58] sm:$0xff]
      %v1224 = vld [vmem:[%s1211 + $0x60] sm:$0xff]
      %v1225 = vld [vmem:[%s1211 + $0x68] sm:$0xff]
      %v1226 = vld [vmem:[%s1211 + $0x70] sm:$0xff]
      %v1227 = vld [vmem:[%s1211 + $0x78] sm:$0xff]
      %v1228 = vld [vmem:[%s1211 + $0x80] sm:$0xff]
      %v1229 = vld [vmem:[%s1211 + $0x88] sm:$0xff]
      %v1230 = vld [vmem:[%s1211 + $0x90] sm:$0xff]
      %v1231 = vld [vmem:[%s1211 + $0x98] sm:$0xff]
      %1252 = vrot.lane.b32.xlu0 %v1168, 64
      %v1253 = vpop.permute.xlu0 %1252
      %1254 = vrot.lane.b32.xlu0 %v1169, 64
      %v1255 = vpop.permute.xlu0 %1254
      %1256 = vrot.lane.b32.xlu0 %v1170, 64
      %v1257 = vpop.permute.xlu0 %1256
      %1258 = vrot.lane.b32.xlu0 %v1171, 64
      %v1259 = vpop.permute.xlu0 %1258
      %1260 = vrot.lane.b32.xlu0 %v1172, 64
      %v1261 = vpop.permute.xlu0 %1260
      %1262 = vrot.lane.b32.xlu0 %v1173, 64
      %v1263 = vpop.permute.xlu0 %1262
      %1264 = vrot.lane.b32.xlu0 %v1174, 64
      %v1265 = vpop.permute.xlu0 %1264
      %1266 = vrot.lane.b32.xlu0 %v1175, 64
      %v1267 = vpop.permute.xlu0 %1266
      %1268 = vrot.lane.b32.xlu0 %v1176, 64
      %v1269 = vpop.permute.xlu0 %1268
      %1270 = vrot.lane.b32.xlu0 %v1177, 64
      %v1271 = vpop.permute.xlu0 %1270
      %1272 = vrot.lane.b32.xlu0 %v1178, 64
      %v1273 = vpop.permute.xlu0 %1272
      %1274 = vrot.lane.b32.xlu0 %v1179, 64
      %v1275 = vpop.permute.xlu0 %1274
      %1276 = vrot.lane.b32.xlu0 %v1180, 64
      %v1277 = vpop.permute.xlu0 %1276
      %1278 = vrot.lane.b32.xlu0 %v1181, 64
      %v1279 = vpop.permute.xlu0 %1278
      %1280 = vrot.lane.b32.xlu0 %v1182, 64
      %v1281 = vpop.permute.xlu0 %1280
      %1282 = vrot.lane.b32.xlu0 %v1183, 64
      %v1283 = vpop.permute.xlu0 %1282
      %1284 = vrot.lane.b32.xlu0 %v1184, 64
      %v1285 = vpop.permute.xlu0 %1284
      %1286 = vrot.lane.b32.xlu0 %v1185, 64
      %v1287 = vpop.permute.xlu0 %1286
      %1288 = vrot.lane.b32.xlu0 %v1186, 64
      %v1289 = vpop.permute.xlu0 %1288
      %1290 = vrot.lane.b32.xlu0 %v1187, 64
      %v1291 = vpop.permute.xlu0 %1290
      %1332 = vrot.lane.b32.xlu0 %v1212, 64
      %v1333 = vpop.permute.xlu0 %1332
      %1334 = vrot.lane.b32.xlu0 %v1213, 64
      %v1335 = vpop.permute.xlu0 %1334
      %1336 = vrot.lane.b32.xlu0 %v1214, 64
      %v1337 = vpop.permute.xlu0 %1336
      %1338 = vrot.lane.b32.xlu0 %v1215, 64
      %v1339 = vpop.permute.xlu0 %1338
      %1340 = vrot.lane.b32.xlu0 %v1216, 64
      %v1341 = vpop.permute.xlu0 %1340
      %1342 = vrot.lane.b32.xlu0 %v1217, 64
      %v1343 = vpop.permute.xlu0 %1342
      %1344 = vrot.lane.b32.xlu0 %v1218, 64
      %v1345 = vpop.permute.xlu0 %1344
      %1346 = vrot.lane.b32.xlu0 %v1219, 64
      %v1347 = vpop.permute.xlu0 %1346
      %1348 = vrot.lane.b32.xlu0 %v1220, 64
      %v1349 = vpop.permute.xlu0 %1348
      %1350 = vrot.lane.b32.xlu0 %v1221, 64
      %v1351 = vpop.permute.xlu0 %1350
      %1352 = vrot.lane.b32.xlu0 %v1222, 64
      %v1353 = vpop.permute.xlu0 %1352
      %1354 = vrot.lane.b32.xlu0 %v1223, 64
      %v1355 = vpop.permute.xlu0 %1354
      %1356 = vrot.lane.b32.xlu0 %v1224, 64
      %v1357 = vpop.permute.xlu0 %1356
      %1358 = vrot.lane.b32.xlu0 %v1225, 64
      %v1359 = vpop.permute.xlu0 %1358
      %1360 = vrot.lane.b32.xlu0 %v1226, 64
      %v1361 = vpop.permute.xlu0 %1360
      %1362 = vrot.lane.b32.xlu0 %v1227, 64
      %v1363 = vpop.permute.xlu0 %1362
      %1364 = vrot.lane.b32.xlu0 %v1228, 64
      %v1365 = vpop.permute.xlu0 %1364
      %1366 = vrot.lane.b32.xlu0 %v1229, 64
      %v1367 = vpop.permute.xlu0 %1366
      %1368 = vrot.lane.b32.xlu0 %v1230, 64
      %v1369 = vpop.permute.xlu0 %1368
      %1370 = vrot.lane.b32.xlu0 %v1231, 64
      %v1371 = vpop.permute.xlu0 %1370
      %v1392 = vsel %vm442, %v1146, %v1253
      %v1393 = vsel %vm442, %v1147, %v1255
      %v1394 = vsel %vm442, %v1148, %v1257
      %v1395 = vsel %vm442, %v1149, %v1259
      %v1396 = vsel %vm442, %v1150, %v1261
      %v1397 = vsel %vm442, %v1151, %v1263
      %v1398 = vsel %vm442, %v1152, %v1265
      %v1399 = vsel %vm442, %v1153, %v1267
      %v1400 = vsel %vm442, %v1154, %v1269
      %v1401 = vsel %vm442, %v1155, %v1271
      %v1402 = vsel %vm442, %v1156, %v1273
      %v1403 = vsel %vm442, %v1157, %v1275
      %v1404 = vsel %vm442, %v1158, %v1277
      %v1405 = vsel %vm442, %v1159, %v1279
      %v1406 = vsel %vm442, %v1160, %v1281
      %v1407 = vsel %vm442, %v1161, %v1283
      %v1408 = vsel %vm442, %v1162, %v1285
      %v1409 = vsel %vm442, %v1163, %v1287
      %v1410 = vsel %vm442, %v1164, %v1289
      %v1411 = vsel %vm442, %v1165, %v1291
      %v1412 = vsel %vm442, %v1190, %v1333
      %v1413 = vsel %vm442, %v1191, %v1335
      %v1414 = vsel %vm442, %v1192, %v1337
      %v1415 = vsel %vm442, %v1193, %v1339
      %v1416 = vsel %vm442, %v1194, %v1341
      %v1417 = vsel %vm442, %v1195, %v1343
      %v1418 = vsel %vm442, %v1196, %v1345
      %v1419 = vsel %vm442, %v1197, %v1347
      %v1420 = vsel %vm442, %v1198, %v1349
      %v1421 = vsel %vm442, %v1199, %v1351
      %v1422 = vsel %vm442, %v1200, %v1353
      %v1423 = vsel %vm442, %v1201, %v1355
      %v1424 = vsel %vm442, %v1202, %v1357
      %v1425 = vsel %vm442, %v1203, %v1359
      %v1426 = vsel %vm442, %v1204, %v1361
      %v1427 = vsel %vm442, %v1205, %v1363
      %v1428 = vsel %vm442, %v1206, %v1365
      %v1429 = vsel %vm442, %v1207, %v1367
      %v1430 = vsel %vm442, %v1208, %v1369
      %v1431 = vsel %vm442, %v1209, %v1371
      %s1432 = scalar_lea.vmem %s1, 512
      %v1433 = vld [vmem:[%s1432] sm:$0xff]
      %v1434 = vld [vmem:[%s1432 + $0x8] sm:$0xff]
      %v1435 = vld [vmem:[%s1432 + $0x10] sm:$0xff]
      %v1436 = vld [vmem:[%s1432 + $0x18] sm:$0xff]
      %v1437 = vld [vmem:[%s1432 + $0x20] sm:$0xff]
      %v1438 = vld [vmem:[%s1432 + $0x28] sm:$0xff]
      %v1439 = vld [vmem:[%s1432 + $0x30] sm:$0xff]
      %v1440 = vld [vmem:[%s1432 + $0x38] sm:$0xff]
      %v1441 = vld [vmem:[%s1432 + $0x40] sm:$0xff]
      %v1442 = vld [vmem:[%s1432 + $0x48] sm:$0xff]
      %v1443 = vld [vmem:[%s1432 + $0x50] sm:$0xff]
      %v1444 = vld [vmem:[%s1432 + $0x58] sm:$0xff]
      %v1445 = vld [vmem:[%s1432 + $0x60] sm:$0xff]
      %v1446 = vld [vmem:[%s1432 + $0x68] sm:$0xff]
      %v1447 = vld [vmem:[%s1432 + $0x70] sm:$0xff]
      %v1448 = vld [vmem:[%s1432 + $0x78] sm:$0xff]
      %v1449 = vld [vmem:[%s1432 + $0x80] sm:$0xff]
      %v1450 = vld [vmem:[%s1432 + $0x88] sm:$0xff]
      %v1451 = vld [vmem:[%s1432 + $0x90] sm:$0xff]
      %v1452 = vld [vmem:[%s1432 + $0x98] sm:$0xff]
      %v1453 = vld [vmem:[%s1432 + $0xa0] sm:$0xff]
      %v1454 = vld [vmem:[%s1432 + $0xa8] sm:$0xff]
      %v1455 = vld [vmem:[%s1432 + $0xb0] sm:$0xff]
      %v1456 = vld [vmem:[%s1432 + $0xb8] sm:$0xff]
      %v1457 = vld [vmem:[%s1432 + $0xc0] sm:$0xff]
      %v1458 = vld [vmem:[%s1432 + $0xc8] sm:$0xff]
      %v1459 = vld [vmem:[%s1432 + $0xd0] sm:$0xff]
      %v1460 = vld [vmem:[%s1432 + $0xd8] sm:$0xff]
      %v1461 = vld [vmem:[%s1432 + $0xe0] sm:$0xff]
      %v1462 = vld [vmem:[%s1432 + $0xe8] sm:$0xff]
      %v1463 = vld [vmem:[%s1432 + $0xf0] sm:$0xff]
      %v1464 = vld [vmem:[%s1432 + $0xf8] sm:$0xff]
      %1465 = vmatpush.msra.mxu0 %v1448
      %1466 = vmatpush.msra.mxu0 %v1447
      %1467 = vmatpush.msra.mxu0 %v1446
      %1468 = vmatpush.msra.mxu0 %v1445
      %1469 = vmatpush.msra.mxu0 %v1444
      %1470 = vmatpush.msra.mxu0 %v1443
      %1471 = vmatpush.msra.mxu0 %v1442
      %1472 = vmatpush.msra.mxu0 %v1441
      %1473 = vmatpush.msra.mxu0 %v1440
      %1474 = vmatpush.msra.mxu0 %v1439
      %1475 = vmatpush.msra.mxu0 %v1438
      %1476 = vmatpush.msra.mxu0 %v1437
      %1477 = vmatpush.msra.mxu0 %v1436
      %1478 = vmatpush.msra.mxu0 %v1435
      %1479 = vmatpush.msra.mxu0 %v1434
      %1480 = vmatpush.msra.mxu0 %v1433
      %1481 = vmatmul.f32.gmra.mxu0 %v1392
      %v1482 = vpop.f32.mrf.mxu0
      %v1483 = vadd.f32 0.0, %v1482
      %1484 = vmatmul.f32.gmra.mxu0 %v1393
      %v1485 = vpop.f32.mrf.mxu0
      %v1486 = vadd.f32 0.0, %v1485
      %1487 = vmatmul.f32.gmra.mxu0 %v1394
      %v1488 = vpop.f32.mrf.mxu0
      %v1489 = vadd.f32 0.0, %v1488
      %1490 = vmatmul.f32.gmra.mxu0 %v1395
      %v1491 = vpop.f32.mrf.mxu0
      %v1492 = vadd.f32 0.0, %v1491
      %1493 = vmatmul.f32.gmra.mxu0 %v1396
      %v1494 = vpop.f32.mrf.mxu0
      %v1495 = vadd.f32 0.0, %v1494
      %1496 = vmatmul.f32.gmra.mxu0 %v1397
      %v1497 = vpop.f32.mrf.mxu0
      %v1498 = vadd.f32 0.0, %v1497
      %1499 = vmatmul.f32.gmra.mxu0 %v1398
      %v1500 = vpop.f32.mrf.mxu0
      %v1501 = vadd.f32 0.0, %v1500
      %1502 = vmatmul.f32.gmra.mxu0 %v1399
      %v1503 = vpop.f32.mrf.mxu0
      %v1504 = vadd.f32 0.0, %v1503
      %1505 = vmatmul.f32.gmra.mxu0 %v1400
      %v1506 = vpop.f32.mrf.mxu0
      %v1507 = vadd.f32 0.0, %v1506
      %1508 = vmatmul.f32.gmra.mxu0 %v1401
      %v1509 = vpop.f32.mrf.mxu0
      %v1510 = vadd.f32 0.0, %v1509
      %1511 = vmatmul.f32.gmra.mxu0 %v1402
      %v1512 = vpop.f32.mrf.mxu0
      %v1513 = vadd.f32 0.0, %v1512
      %1514 = vmatmul.f32.gmra.mxu0 %v1403
      %v1515 = vpop.f32.mrf.mxu0
      %v1516 = vadd.f32 0.0, %v1515
      %1517 = vmatmul.f32.gmra.mxu0 %v1404
      %v1518 = vpop.f32.mrf.mxu0
      %v1519 = vadd.f32 0.0, %v1518
      %1520 = vmatmul.f32.gmra.mxu0 %v1405
      %v1521 = vpop.f32.mrf.mxu0
      %v1522 = vadd.f32 0.0, %v1521
      %1523 = vmatmul.f32.gmra.mxu0 %v1406
      %v1524 = vpop.f32.mrf.mxu0
      %v1525 = vadd.f32 0.0, %v1524
      %1526 = vmatmul.f32.gmra.mxu0 %v1407
      %v1527 = vpop.f32.mrf.mxu0
      %v1528 = vadd.f32 0.0, %v1527
      %1529 = vmatmul.f32.gmra.mxu0 %v1408
      %v1530 = vpop.f32.mrf.mxu0
      %v1531 = vadd.f32 0.0, %v1530
      %1532 = vmatmul.f32.gmra.mxu0 %v1409
      %v1533 = vpop.f32.mrf.mxu0
      %v1534 = vadd.f32 0.0, %v1533
      %1535 = vmatmul.f32.gmra.mxu0 %v1410
      %v1536 = vpop.f32.mrf.mxu0
      %v1537 = vadd.f32 0.0, %v1536
      %1538 = vmatmul.f32.gmra.mxu0 %v1411
      %v1539 = vpop.f32.mrf.mxu0
      %v1540 = vadd.f32 0.0, %v1539
      %1541 = vdwg.mxu0
      %1542 = vmatpush.msra.mxu0 %v1464
      %1543 = vmatpush.msra.mxu0 %v1463
      %1544 = vmatpush.msra.mxu0 %v1462
      %1545 = vmatpush.msra.mxu0 %v1461
      %1546 = vmatpush.msra.mxu0 %v1460
      %1547 = vmatpush.msra.mxu0 %v1459
      %1548 = vmatpush.msra.mxu0 %v1458
      %1549 = vmatpush.msra.mxu0 %v1457
      %1550 = vmatpush.msra.mxu0 %v1456
      %1551 = vmatpush.msra.mxu0 %v1455
      %1552 = vmatpush.msra.mxu0 %v1454
      %1553 = vmatpush.msra.mxu0 %v1453
      %1554 = vmatpush.msra.mxu0 %v1452
      %1555 = vmatpush.msra.mxu0 %v1451
      %1556 = vmatpush.msra.mxu0 %v1450
      %1557 = vmatpush.msra.mxu0 %v1449
      %1558 = vmatmul.f32.gmra.mxu0 %v1412
      %v1559 = vpop.f32.mrf.mxu0
      %v1560 = vadd.f32 %v1483, %v1559
      %1561 = vmatmul.f32.gmra.mxu0 %v1413
      %v1562 = vpop.f32.mrf.mxu0
      %v1563 = vadd.f32 %v1486, %v1562
      %1564 = vmatmul.f32.gmra.mxu0 %v1414
      %v1565 = vpop.f32.mrf.mxu0
      %v1566 = vadd.f32 %v1489, %v1565
      %1567 = vmatmul.f32.gmra.mxu0 %v1415
      %v1568 = vpop.f32.mrf.mxu0
      %v1569 = vadd.f32 %v1492, %v1568
      %1570 = vmatmul.f32.gmra.mxu0 %v1416
      %v1571 = vpop.f32.mrf.mxu0
      %v1572 = vadd.f32 %v1495, %v1571
      %1573 = vmatmul.f32.gmra.mxu0 %v1417
      %v1574 = vpop.f32.mrf.mxu0
      %v1575 = vadd.f32 %v1498, %v1574
      %1576 = vmatmul.f32.gmra.mxu0 %v1418
      %v1577 = vpop.f32.mrf.mxu0
      %v1578 = vadd.f32 %v1501, %v1577
      %1579 = vmatmul.f32.gmra.mxu0 %v1419
      %v1580 = vpop.f32.mrf.mxu0
      %v1581 = vadd.f32 %v1504, %v1580
      %1582 = vmatmul.f32.gmra.mxu0 %v1420
      %v1583 = vpop.f32.mrf.mxu0
      %v1584 = vadd.f32 %v1507, %v1583
      %1585 = vmatmul.f32.gmra.mxu0 %v1421
      %v1586 = vpop.f32.mrf.mxu0
      %v1587 = vadd.f32 %v1510, %v1586
      %1588 = vmatmul.f32.gmra.mxu0 %v1422
      %v1589 = vpop.f32.mrf.mxu0
      %v1590 = vadd.f32 %v1513, %v1589
      %1591 = vmatmul.f32.gmra.mxu0 %v1423
      %v1592 = vpop.f32.mrf.mxu0
      %v1593 = vadd.f32 %v1516, %v1592
      %1594 = vmatmul.f32.gmra.mxu0 %v1424
      %v1595 = vpop.f32.mrf.mxu0
      %v1596 = vadd.f32 %v1519, %v1595
      %1597 = vmatmul.f32.gmra.mxu0 %v1425
      %v1598 = vpop.f32.mrf.mxu0
      %v1599 = vadd.f32 %v1522, %v1598
      %1600 = vmatmul.f32.gmra.mxu0 %v1426
      %v1601 = vpop.f32.mrf.mxu0
      %v1602 = vadd.f32 %v1525, %v1601
      %1603 = vmatmul.f32.gmra.mxu0 %v1427
      %v1604 = vpop.f32.mrf.mxu0
      %v1605 = vadd.f32 %v1528, %v1604
      %1606 = vmatmul.f32.gmra.mxu0 %v1428
      %v1607 = vpop.f32.mrf.mxu0
      %v1608 = vadd.f32 %v1531, %v1607
      %1609 = vmatmul.f32.gmra.mxu0 %v1429
      %v1610 = vpop.f32.mrf.mxu0
      %v1611 = vadd.f32 %v1534, %v1610
      %1612 = vmatmul.f32.gmra.mxu0 %v1430
      %v1613 = vpop.f32.mrf.mxu0
      %v1614 = vadd.f32 %v1537, %v1613
      %1615 = vmatmul.f32.gmra.mxu0 %v1431
      %v1616 = vpop.f32.mrf.mxu0
      %v1617 = vadd.f32 %v1540, %v1616
      %1618 = vdwg.mxu0
      %v1619 = vadd.f32 %v1085, %v1560
      %v1620 = vadd.f32 %v1088, %v1563
      %v1621 = vadd.f32 %v1091, %v1566
      %v1622 = vadd.f32 %v1094, %v1569
      %v1623 = vadd.f32 %v1097, %v1572
      %v1624 = vadd.f32 %v1100, %v1575
      %v1625 = vadd.f32 %v1103, %v1578
      %v1626 = vadd.f32 %v1106, %v1581
      %v1627 = vadd.f32 %v1109, %v1584
      %v1628 = vadd.f32 %v1112, %v1587
      %v1629 = vadd.f32 %v1115, %v1590
      %v1630 = vadd.f32 %v1118, %v1593
      %v1631 = vadd.f32 %v1121, %v1596
      %v1632 = vadd.f32 %v1124, %v1599
      %v1633 = vadd.f32 %v1127, %v1602
      %v1634 = vadd.f32 %v1130, %v1605
      %v1635 = vadd.f32 %v1133, %v1608
      %v1636 = vadd.f32 %v1136, %v1611
      %v1637 = vadd.f32 %v1139, %v1614
      %v1638 = vadd.f32 %v1142, %v1617
      %v1639 = vld [vmem:[%s2] sm:$0x1]
      %v1641 = vperm.slane %v1639, 0
      %v1643 = vadd.f32 %v1619, %v1641
      %v1644 = vadd.f32 %v1620, %v1641
      %v1645 = vadd.f32 %v1621, %v1641
      %v1646 = vadd.f32 %v1622, %v1641
      %v1647 = vadd.f32 %v1623, %v1641
      %v1648 = vadd.f32 %v1624, %v1641
      %v1649 = vadd.f32 %v1625, %v1641
      %v1650 = vadd.f32 %v1626, %v1641
      %v1651 = vadd.f32 %v1627, %v1641
      %v1652 = vadd.f32 %v1628, %v1641
      %v1653 = vadd.f32 %v1629, %v1641
      %v1654 = vadd.f32 %v1630, %v1641
      %v1655 = vadd.f32 %v1631, %v1641
      %v1656 = vadd.f32 %v1632, %v1641
      %v1657 = vadd.f32 %v1633, %v1641
      %v1658 = vadd.f32 %v1634, %v1641
      %v1659 = vadd.f32 %v1635, %v1641
      %v1660 = vadd.f32 %v1636, %v1641
      %v1661 = vadd.f32 %v1637, %v1641
      %v1662 = vadd.f32 %v1638, %v1641
      %1663 = vst [vmem:[%s192] sm:$0xff] %v1643
      %1664 = vst [vmem:[%s192 + $0x8] sm:$0xff] %v1644
      %1665 = vst [vmem:[%s192 + $0x10] sm:$0xff] %v1645
      %1666 = vst [vmem:[%s192 + $0x18] sm:$0xff] %v1646
      %1667 = vst [vmem:[%s192 + $0x20] sm:$0xff] %v1647
      %1668 = vst [vmem:[%s192 + $0x28] sm:$0xff] %v1648
      %1669 = vst [vmem:[%s192 + $0x30] sm:$0xff] %v1649
      %1670 = vst [vmem:[%s192 + $0x38] sm:$0xff] %v1650
      %1671 = vst [vmem:[%s192 + $0x40] sm:$0xff] %v1651
      %1672 = vst [vmem:[%s192 + $0x48] sm:$0xff] %v1652
      %1673 = vst [vmem:[%s192 + $0x50] sm:$0xff] %v1653
      %1674 = vst [vmem:[%s192 + $0x58] sm:$0xff] %v1654
      %1675 = vst [vmem:[%s192 + $0x60] sm:$0xff] %v1655
      %1676 = vst [vmem:[%s192 + $0x68] sm:$0xff] %v1656
      %1677 = vst [vmem:[%s192 + $0x70] sm:$0xff] %v1657
      %1678 = vst [vmem:[%s192 + $0x78] sm:$0xff] %v1658
      %1679 = vst [vmem:[%s192 + $0x80] sm:$0xff] %v1659
      %1680 = vst [vmem:[%s192 + $0x88] sm:$0xff] %v1660
      %1681 = vst [vmem:[%s192 + $0x90] sm:$0xff] %v1661
      %1682 = vst [vmem:[%s192 + $0x98] sm:$0xff] %v1662
      %s1683 = smul.u32 20, %s19
      %p1684 = scmp.lt.s32.totalorder %s18, 1
      %s1685 = scalar_select %p1684, %s18, 1
      %p1686 = scmp.lt.s32.totalorder %s1683, 39
      %s1687 = scalar_select %p1686, %s1683, 39
      %s1688 = smul.addr %s1685, 40
      %s1689 = sadd.s32 %s1687, %s1688
      %s1690 = smul.addr %s1689, 8
      %s1691 = scalar_lea.vmem %s3, %s1690
      // Predicated region
      $region33: #{context_prediction_pallas.1} parent=31 // pred_check
        %p1692 = pneg %p114
      $region34: #{context_prediction_pallas.1} parent=31 // pred_check_branch
        %1694 = sbr.rel (%p1692) target = $region36
      $region35: #{context_prediction_pallas.1} parent=31 // pred_region
        %s1695 = smul.u32 20, %s19
      $region36: #{context_prediction_pallas.1} parent=31 // pred_fallthru
        _
    $region32: #{context_prediction_pallas.1} parent=5 // pred_fallthru
      _
    %p1696 = scmp.le.s32.totalorder 2, %s9
    // Predicated region
    $region37: #{context_prediction_pallas.1} parent=5 // pred_check
      %p1697 = pneg %p1696
    $region38: #{context_prediction_pallas.1} parent=5 // pred_check_branch
      %1699 = sbr.rel (%p1697) target = $region40
    $region39: #{context_prediction_pallas.1} parent=5 // pred_region
      %s1700 = ssub.s32 %s9, 2
      // Predicated region
      $region41: #{context_prediction_pallas.1} parent=39 // pred_check
        %p1701 = pneg %p120
      $region42: #{context_prediction_pallas.1} parent=39 // pred_check_branch
        %1703 = sbr.rel (%p1701) target = $region44
      $region43: #{context_prediction_pallas.1} parent=39 // pred_region
        %s1704 = smul.u32 20, %s21
        %p1705 = scmp.lt.s32.totalorder %s20, 1
        %s1706 = scalar_select %p1705, %s20, 1
        %p1707 = scmp.lt.s32.totalorder %s1704, 39
        %s1708 = scalar_select %p1707, %s1704, 39
        %s1709 = smul.addr %s1706, 40
        %s1710 = sadd.s32 %s1708, %s1709
        %s1711 = smul.addr %s1710, 8
        %s1712 = scalar_lea.vmem %s3, %s1711
      $region44: #{context_prediction_pallas.1} parent=39 // pred_fallthru
        _
    $region40: #{context_prediction_pallas.1} parent=5 // pred_fallthru
      _
  $region6: #{context_prediction_pallas.1} parent=0 // loop_footer
    %s13 = sadd.s32 1, %s9
  $region7: #{context_prediction_pallas.1} parent=0 // loop_footer_branch
    %8 = sbr.rel target = $region3
  $region8: #{context_prediction_pallas.1} parent=0 // loop_exit
    _

</llo_original>
